<compile_context>
chip_gen: v6e
topology: v6e:2x2x1
jax: 0.10.0
libtpu: 0.0.40
codegen_flags: <defaults>
</compile_context>

<pallas_src>
import functools

import jax
import jax.numpy as jnp
import numpy as np
from jax import lax
from jax.experimental import pallas as pl
from jax.experimental.pallas import tpu as pltpu


def _round_up(x, m):
    return ((x + m - 1) // m) * m


def _gru_kernel(gx_ref, h0_ref, whh_ref, bhn_ref, out_ref, h_scratch):
    """One grid step == one block of `Tc` GRU time steps.

    gx_ref  : (Tc, B, 3H)  hoisted input gates  x@W_ih + b_ih + [b_hr, b_hz, 0]
                           gate order along the last axis: (r, z, n)
    h0_ref  : (B, H)       initial hidden state (resident)
    whh_ref : (H, 3H)      fused recurrent weights (resident)
    bhn_ref : (1, H)       recurrent bias of the n gate (must stay inside r*(...))
    out_ref : (Tc, B, H)   GRU outputs for this time block
    h_scratch : VMEM (B, H) f32 recurrent carry across grid steps
    """
    H = whh_ref.shape[0]

    @pl.when(pl.program_id(0) == 0)
    def _():
        h_scratch[...] = h0_ref[...]

    whh = whh_ref[...]          # hoisted out of the time loop
    bhn = bhn_ref[...]

    def step(i, h):
        gx = gx_ref[i]                                                # (B, 3H)
        hg = jnp.dot(h, whh, preferred_element_type=jnp.float32)      # one fused MXU matmul
        r = jax.nn.sigmoid(gx[:, 0:H] + hg[:, 0:H])
        z = jax.nn.sigmoid(gx[:, H:2 * H] + hg[:, H:2 * H])
        n = jnp.tanh(gx[:, 2 * H:] + r * (hg[:, 2 * H:] + bhn))
        h_new = n + z * (h - n)                                       # == (1-z)*n + z*h
        out_ref[i] = h_new
        return h_new

    h_last = lax.fori_loop(0, out_ref.shape[0], step, h_scratch[...], unroll=True)
    h_scratch[...] = h_last


def gru_pallas(emb, h0, w_ih, w_hh, b_ih, b_hh, *, time_block=8):
    """Single-layer GRU with PyTorch semantics (gate order r, z, n).

    emb  : (T, B, H) f32 embedded inputs (seq-first).
    h0   : (1, B, H) f32 initial hidden state.
    w_ih, w_hh : (H, 3H) weights, pre-transposed for `x @ W`, gates (r, z, n).
    b_ih, b_hh : (3H,)   biases.

    Returns (output (T, B, H), h_n (1, B, H)).
    """
    T, B, H = emb.shape
    f32 = jnp.float32

    # ---- hoisted input projection: one big parallel matmul over all T*B rows.
    #      Also fold b_hr, b_hz into the input-side bias (b_hn must stay inside
    #      the r * (...) term, so it is passed to the kernel separately).
    b_x = b_ih + jnp.concatenate(
        [b_hh[:H], b_hh[H:2 * H], jnp.zeros((H,), f32)])
    gates_x = jnp.einsum("tbh,hg->tbg", emb, w_ih) + b_x              # (T, B, 3H)
    b_hn = b_hh[2 * H:]

    # ---- pad to TPU-friendly shapes: sublane multiple of 8 (B), lane multiple
    #      of 128 (H), and a whole number of time blocks.
    Tc = max(1, min(time_block, T))
    Tp = _round_up(T, Tc)
    Bp = _round_up(B, 8)
    Hp = _round_up(H, 128)

    gx = gates_x.reshape(T, B, 3, H)
    gx = jnp.pad(gx, ((0, Tp - T), (0, Bp - B), (0, 0), (0, Hp - H)))
    gx = gx.reshape(Tp, Bp, 3 * Hp)

    whh = w_hh.reshape(H, 3, H)
    whh = jnp.pad(whh, ((0, Hp - H), (0, 0), (0, Hp - H))).reshape(Hp, 3 * Hp)

    bhn = jnp.pad(b_hn, (0, Hp - H)).reshape(1, Hp)
    h0p = jnp.pad(h0[0].astype(f32), ((0, Bp - B), (0, Hp - H)))

    grid_spec = pltpu.PrefetchScalarGridSpec(
        num_scalar_prefetch=0,
        grid=(Tp // Tc,),
        in_specs=[
            pl.BlockSpec((Tc, Bp, 3 * Hp), lambda t: (t, 0, 0)),   # gates_x (streamed)
            pl.BlockSpec((Bp, Hp), lambda t: (0, 0)),              # h0      (resident)
            pl.BlockSpec((Hp, 3 * Hp), lambda t: (0, 0)),          # W_hh    (resident)
            pl.BlockSpec((1, Hp), lambda t: (0, 0)),               # b_hn    (resident)
        ],
        out_specs=pl.BlockSpec((Tc, Bp, Hp), lambda t: (t, 0, 0)),
        scratch_shapes=[pltpu.VMEM((Bp, Hp), f32)],
    )

    out_p = pl.pallas_call(
        _gru_kernel,
        out_shape=jax.ShapeDtypeStruct((Tp, Bp, Hp), f32),
        grid_spec=grid_spec,
        compiler_params=pltpu.CompilerParams(
            dimension_semantics=("arbitrary",),   # true recurrence over time
        ),
    )(gx, h0p, whh, bhn)

    output = out_p[:T, :B, :H]
    h_n = output[-1:]                             # (1, B, H): h_n == last output
    return output, h_n


class EncoderRNNPallas:
    """JAX/Pallas port of the PyTorch EncoderRNN (Embedding + GRU)."""

    def __init__(self, input_vocabulary_size, batch_size, hidden_size, key):
        self.batch_size = batch_size
        self.hidden_size = hidden_size
        H = hidden_size
        k_emb, k_wih, k_whh, k_bih, k_bhh = jax.random.split(key, 5)

        # nn.Embedding default init: N(0, 1)
        self.embedding = jax.random.normal(
            k_emb, (input_vocabulary_size, H), dtype=jnp.float32)

        # nn.GRU default init: U(-1/sqrt(H), 1/sqrt(H)); fused gate layout
        # (H, 3H), gate order (r, z, n), pre-transposed so kernels compute x @ W.
        bound = 1.0 / np.sqrt(H)
        self.w_ih = jax.random.uniform(k_wih, (H, 3 * H), jnp.float32, -bound, bound)
        self.w_hh = jax.random.uniform(k_whh, (H, 3 * H), jnp.float32, -bound, bound)
        self.b_ih = jax.random.uniform(k_bih, (3 * H,), jnp.float32, -bound, bound)
        self.b_hh = jax.random.uniform(k_bhh, (3 * H,), jnp.float32, -bound, bound)

    def init_hidden(self):
        return jnp.zeros((1, self.batch_size, self.hidden_size), jnp.float32)

    @functools.partial(jax.jit, static_argnums=0)
    def __call__(self, input_ids, hidden):
        # embedding lookup (gather) + view(-1, B, H) -- plain-JAX glue
        embeded = self.embedding[input_ids].reshape(
            -1, self.batch_size, self.hidden_size)
        return gru_pallas(embeded, hidden,
                          self.w_ih, self.w_hh, self.b_ih, self.b_hh)


def _gru_reference(x, h0, w_ih, w_hh, b_ih, b_hh):
    """Pure-JAX reference (lax.scan), PyTorch GRU gate equations."""
    H = x.shape[-1]

    def step(h, x_t):
        gi = x_t @ w_ih + b_ih
        gh = h @ w_hh + b_hh
        r = jax.nn.sigmoid(gi[:, :H] + gh[:, :H])
        z = jax.nn.sigmoid(gi[:, H:2 * H] + gh[:, H:2 * H])
        n = jnp.tanh(gi[:, 2 * H:] + r * gh[:, 2 * H:])
        h_new = (1.0 - z) * n + z * h
        return h_new, h_new

    h_last, outs = lax.scan(step, h0[0], x)
    return outs, h_last[None]


if __name__ == "__main__":
    # Small, deterministic example shapes.
    vocab_size = 20
    seq_len = 8
    batch_size = 4
    hidden_size = 32

    key = jax.random.PRNGKey(0)
    k_params, k_input = jax.random.split(key)

    encoder = EncoderRNNPallas(vocab_size, batch_size, hidden_size, k_params)

    # Token ids, shape (seq_len, batch_size) -- seq-first like PyTorch GRU.
    input_ids = jax.random.randint(
        k_input, (seq_len, batch_size), 0, vocab_size, dtype=jnp.int32)
    hidden0 = encoder.init_hidden()

    output, hidden_n = encoder(input_ids, hidden0)
    jax.block_until_ready((output, hidden_n))

    # Correctness check against a pure-JAX GRU reference.
    embeded = encoder.embedding[input_ids].reshape(-1, batch_size, hidden_size)
    ref_out, ref_hn = _gru_reference(
        embeded, hidden0, encoder.w_ih, encoder.w_hh, encoder.b_ih, encoder.b_hh)

    assert output.shape == (seq_len, batch_size, hidden_size)
    assert hidden_n.shape == (1, batch_size, hidden_size)
    np.testing.assert_allclose(np.asarray(output), np.asarray(ref_out),
                               rtol=1e-4, atol=1e-5)
    np.testing.assert_allclose(np.asarray(hidden_n), np.asarray(ref_hn),
                               rtol=1e-4, atol=1e-5)

    print("KERNEL_OK")
</pallas_src>

<mosaic_0001>
module attributes {stable_mosaic.version = 11 : i64} {
  func.func @_gru_kernel(%arg0: i32, %arg1: memref<8x8x384xf32, #tpu.memory_space<vmem>>, %arg2: memref<8x128xf32, #tpu.memory_space<vmem>>, %arg3: memref<128x384xf32, #tpu.memory_space<vmem>>, %arg4: memref<1x128xf32, #tpu.memory_space<vmem>>, %arg5: memref<8x8x128xf32, #tpu.memory_space<vmem>>, %arg6: memref<8x128xf32, #tpu.memory_space<vmem>>) attributes {dimension_semantics = [#tpu.dimension_semantics<arbitrary>], iteration_bounds = array<i64: 1>, scalar_prefetch = 0 : i64, scratch_operands = 1 : i64, tpu.core_type = #tpu.core_type<tc>, window_params = [{transform_indices = @transform_0, window_bounds = array<i64: 8, 8, 384>}, {pipeline_mode = #tpu.pipeline_mode<synchronous>, transform_indices = @transform_1, window_bounds = array<i64: 8, 128>}, {pipeline_mode = #tpu.pipeline_mode<synchronous>, transform_indices = @transform_2, window_bounds = array<i64: 128, 384>}, {pipeline_mode = #tpu.pipeline_mode<synchronous>, transform_indices = @transform_3, window_bounds = array<i64: 1, 128>}, {transform_indices = @transform_4, window_bounds = array<i64: 8, 8, 128>}]} {
    %c0_i32 = arith.constant 0 : i32
    %0 = arith.cmpi eq, %arg0, %c0_i32 : i32
    %1 = arith.extui %0 : i1 to i32
    %c0_i32_0 = arith.constant 0 : i32
    %2 = arith.cmpi ne, %1, %c0_i32_0 : i32
    scf.if %2 {
      %c0_64 = arith.constant 0 : index
      %c0_65 = arith.constant 0 : index
      %279 = vector.load %arg2[%c0_64, %c0_65] : memref<8x128xf32, #tpu.memory_space<vmem>>, vector<8x128xf32>
      %c0_66 = arith.constant 0 : index
      %c0_67 = arith.constant 0 : index
      %280 = vector.load %arg6[%c0_66, %c0_67] : memref<8x128xf32, #tpu.memory_space<vmem>>, vector<8x128xf32>
      tpu.vector_store %arg6[%c0_66, %c0_67], %279 {strides = array<i32>} : memref<8x128xf32, #tpu.memory_space<vmem>>, vector<8x128xf32>,
    } else {
    }
    %c0 = arith.constant 0 : index
    %c0_1 = arith.constant 0 : index
    %3 = vector.load %arg3[%c0, %c0_1] : memref<128x384xf32, #tpu.memory_space<vmem>>, vector<128x384xf32>
    %c0_2 = arith.constant 0 : index
    %c0_3 = arith.constant 0 : index
    %4 = vector.load %arg4[%c0_2, %c0_3] : memref<1x128xf32, #tpu.memory_space<vmem>>, vector<1x128xf32>
    %c0_4 = arith.constant 0 : index
    %c0_5 = arith.constant 0 : index
    %5 = vector.load %arg6[%c0_4, %c0_5] : memref<8x128xf32, #tpu.memory_space<vmem>>, vector<8x128xf32>
    %c0_i32_6 = arith.constant 0 : i32
    %6 = arith.index_cast %c0_i32_6 : i32 to index
    %c0_7 = arith.constant 0 : index
    %c0_8 = arith.constant 0 : index
    %7 = vector.load %arg1[%6, %c0_7, %c0_8] : memref<8x8x384xf32, #tpu.memory_space<vmem>>, vector<1x8x384xf32>
    %8 = vector.shape_cast %7 : vector<1x8x384xf32> to vector<8x384xf32>
    %cst = arith.constant dense<0.000000e+00> : vector<8x384xf32>
    %9 = tpu.matmul %5, %3, %cst {dimension_numbers = #tpu.dot_dimension_numbers<[1], [0], [0], [1], [0, 0, 1, 1], [], []>} : vector<8x128xf32>, vector<128x384xf32>, vector<8x384xf32> -> vector<8x384xf32>
    %10 = vector.extract_strided_slice %8 {offsets = [0, 0], sizes = [8, 128], strides = [1, 1]} : vector<8x384xf32> to vector<8x128xf32>
    %11 = vector.extract_strided_slice %9 {offsets = [0, 0], sizes = [8, 128], strides = [1, 1]} : vector<8x384xf32> to vector<8x128xf32>
    %12 = arith.addf %10, %11 : vector<8x128xf32>
    %13 = arith.negf %12 : vector<8x128xf32>
    %14 = math.exp %13 : vector<8x128xf32>
    %cst_9 = arith.constant 1.000000e+00 : f32
    %15 = vector.broadcast %cst_9 : f32 to vector<8x128xf32>
    %16 = arith.addf %15, %14 : vector<8x128xf32>
    %17 = arith.divf %15, %16 : vector<8x128xf32>
    %18 = vector.extract_strided_slice %8 {offsets = [0, 128], sizes = [8, 128], strides = [1, 1]} : vector<8x384xf32> to vector<8x128xf32>
    %19 = vector.extract_strided_slice %9 {offsets = [0, 128], sizes = [8, 128], strides = [1, 1]} : vector<8x384xf32> to vector<8x128xf32>
    %20 = arith.addf %18, %19 : vector<8x128xf32>
    %21 = arith.negf %20 : vector<8x128xf32>
    %22 = math.exp %21 : vector<8x128xf32>
    %cst_10 = arith.constant 1.000000e+00 : f32
    %23 = vector.broadcast %cst_10 : f32 to vector<8x128xf32>
    %24 = arith.addf %23, %22 : vector<8x128xf32>
    %25 = arith.divf %23, %24 : vector<8x128xf32>
    %26 = vector.extract_strided_slice %8 {offsets = [0, 256], sizes = [8, 128], strides = [1, 1]} : vector<8x384xf32> to vector<8x128xf32>
    %27 = vector.extract_strided_slice %9 {offsets = [0, 256], sizes = [8, 128], strides = [1, 1]} : vector<8x384xf32> to vector<8x128xf32>
    %28 = vector.broadcast %4 : vector<1x128xf32> to vector<8x128xf32>
    %29 = arith.addf %27, %28 : vector<8x128xf32>
    %30 = arith.mulf %17, %29 : vector<8x128xf32>
    %31 = arith.addf %26, %30 : vector<8x128xf32>
    %32 = math.tanh %31 : vector<8x128xf32>
    %33 = arith.subf %5, %32 : vector<8x128xf32>
    %34 = arith.mulf %25, %33 : vector<8x128xf32>
    %35 = arith.addf %32, %34 : vector<8x128xf32>
    %36 = arith.index_cast %c0_i32_6 : i32 to index
    %c0_11 = arith.constant 0 : index
    %c0_12 = arith.constant 0 : index
    %37 = vector.load %arg5[%36, %c0_11, %c0_12] : memref<8x8x128xf32, #tpu.memory_space<vmem>>, vector<1x8x128xf32>
    %38 = vector.shape_cast %37 : vector<1x8x128xf32> to vector<8x128xf32>
    %39 = vector.shape_cast %35 : vector<8x128xf32> to vector<1x8x128xf32>
    tpu.vector_store %arg5[%36, %c0_11, %c0_12], %39 {strides = array<i32>} : memref<8x8x128xf32, #tpu.memory_space<vmem>>, vector<1x8x128xf32>,
    %c1_i32 = arith.constant 1 : i32
    %40 = arith.index_cast %c1_i32 : i32 to index
    %c0_13 = arith.constant 0 : index
    %c0_14 = arith.constant 0 : index
    %41 = vector.load %arg1[%40, %c0_13, %c0_14] : memref<8x8x384xf32, #tpu.memory_space<vmem>>, vector<1x8x384xf32>
    %42 = vector.shape_cast %41 : vector<1x8x384xf32> to vector<8x384xf32>
    %cst_15 = arith.constant dense<0.000000e+00> : vector<8x384xf32>
    %43 = tpu.matmul %35, %3, %cst_15 {dimension_numbers = #tpu.dot_dimension_numbers<[1], [0], [0], [1], [0, 0, 1, 1], [], []>} : vector<8x128xf32>, vector<128x384xf32>, vector<8x384xf32> -> vector<8x384xf32>
    %44 = vector.extract_strided_slice %42 {offsets = [0, 0], sizes = [8, 128], strides = [1, 1]} : vector<8x384xf32> to vector<8x128xf32>
    %45 = vector.extract_strided_slice %43 {offsets = [0, 0], sizes = [8, 128], strides = [1, 1]} : vector<8x384xf32> to vector<8x128xf32>
    %46 = arith.addf %44, %45 : vector<8x128xf32>
    %47 = arith.negf %46 : vector<8x128xf32>
    %48 = math.exp %47 : vector<8x128xf32>
    %cst_16 = arith.constant 1.000000e+00 : f32
    %49 = vector.broadcast %cst_16 : f32 to vector<8x128xf32>
    %50 = arith.addf %49, %48 : vector<8x128xf32>
    %51 = arith.divf %49, %50 : vector<8x128xf32>
    %52 = vector.extract_strided_slice %42 {offsets = [0, 128], sizes = [8, 128], strides = [1, 1]} : vector<8x384xf32> to vector<8x128xf32>
    %53 = vector.extract_strided_slice %43 {offsets = [0, 128], sizes = [8, 128], strides = [1, 1]} : vector<8x384xf32> to vector<8x128xf32>
    %54 = arith.addf %52, %53 : vector<8x128xf32>
    %55 = arith.negf %54 : vector<8x128xf32>
    %56 = math.exp %55 : vector<8x128xf32>
    %cst_17 = arith.constant 1.000000e+00 : f32
    %57 = vector.broadcast %cst_17 : f32 to vector<8x128xf32>
    %58 = arith.addf %57, %56 : vector<8x128xf32>
    %59 = arith.divf %57, %58 : vector<8x128xf32>
    %60 = vector.extract_strided_slice %42 {offsets = [0, 256], sizes = [8, 128], strides = [1, 1]} : vector<8x384xf32> to vector<8x128xf32>
    %61 = vector.extract_strided_slice %43 {offsets = [0, 256], sizes = [8, 128], strides = [1, 1]} : vector<8x384xf32> to vector<8x128xf32>
    %62 = vector.broadcast %4 : vector<1x128xf32> to vector<8x128xf32>
    %63 = arith.addf %61, %62 : vector<8x128xf32>
    %64 = arith.mulf %51, %63 : vector<8x128xf32>
    %65 = arith.addf %60, %64 : vector<8x128xf32>
    %66 = math.tanh %65 : vector<8x128xf32>
    %67 = arith.subf %35, %66 : vector<8x128xf32>
    %68 = arith.mulf %59, %67 : vector<8x128xf32>
    %69 = arith.addf %66, %68 : vector<8x128xf32>
    %70 = arith.index_cast %c1_i32 : i32 to index
    %c0_18 = arith.constant 0 : index
    %c0_19 = arith.constant 0 : index
    %71 = vector.load %arg5[%70, %c0_18, %c0_19] : memref<8x8x128xf32, #tpu.memory_space<vmem>>, vector<1x8x128xf32>
    %72 = vector.shape_cast %71 : vector<1x8x128xf32> to vector<8x128xf32>
    %73 = vector.shape_cast %69 : vector<8x128xf32> to vector<1x8x128xf32>
    tpu.vector_store %arg5[%70, %c0_18, %c0_19], %73 {strides = array<i32>} : memref<8x8x128xf32, #tpu.memory_space<vmem>>, vector<1x8x128xf32>,
    %c2_i32 = arith.constant 2 : i32
    %74 = arith.index_cast %c2_i32 : i32 to index
    %c0_20 = arith.constant 0 : index
    %c0_21 = arith.constant 0 : index
    %75 = vector.load %arg1[%74, %c0_20, %c0_21] : memref<8x8x384xf32, #tpu.memory_space<vmem>>, vector<1x8x384xf32>
    %76 = vector.shape_cast %75 : vector<1x8x384xf32> to vector<8x384xf32>
    %cst_22 = arith.constant dense<0.000000e+00> : vector<8x384xf32>
    %77 = tpu.matmul %69, %3, %cst_22 {dimension_numbers = #tpu.dot_dimension_numbers<[1], [0], [0], [1], [0, 0, 1, 1], [], []>} : vector<8x128xf32>, vector<128x384xf32>, vector<8x384xf32> -> vector<8x384xf32>
    %78 = vector.extract_strided_slice %76 {offsets = [0, 0], sizes = [8, 128], strides = [1, 1]} : vector<8x384xf32> to vector<8x128xf32>
    %79 = vector.extract_strided_slice %77 {offsets = [0, 0], sizes = [8, 128], strides = [1, 1]} : vector<8x384xf32> to vector<8x128xf32>
    %80 = arith.addf %78, %79 : vector<8x128xf32>
    %81 = arith.negf %80 : vector<8x128xf32>
    %82 = math.exp %81 : vector<8x128xf32>
    %cst_23 = arith.constant 1.000000e+00 : f32
    %83 = vector.broadcast %cst_23 : f32 to vector<8x128xf32>
    %84 = arith.addf %83, %82 : vector<8x128xf32>
    %85 = arith.divf %83, %84 : vector<8x128xf32>
    %86 = vector.extract_strided_slice %76 {offsets = [0, 128], sizes = [8, 128], strides = [1, 1]} : vector<8x384xf32> to vector<8x128xf32>
    %87 = vector.extract_strided_slice %77 {offsets = [0, 128], sizes = [8, 128], strides = [1, 1]} : vector<8x384xf32> to vector<8x128xf32>
    %88 = arith.addf %86, %87 : vector<8x128xf32>
    %89 = arith.negf %88 : vector<8x128xf32>
    %90 = math.exp %89 : vector<8x128xf32>
    %cst_24 = arith.constant 1.000000e+00 : f32
    %91 = vector.broadcast %cst_24 : f32 to vector<8x128xf32>
    %92 = arith.addf %91, %90 : vector<8x128xf32>
    %93 = arith.divf %91, %92 : vector<8x128xf32>
    %94 = vector.extract_strided_slice %76 {offsets = [0, 256], sizes = [8, 128], strides = [1, 1]} : vector<8x384xf32> to vector<8x128xf32>
    %95 = vector.extract_strided_slice %77 {offsets = [0, 256], sizes = [8, 128], strides = [1, 1]} : vector<8x384xf32> to vector<8x128xf32>
    %96 = vector.broadcast %4 : vector<1x128xf32> to vector<8x128xf32>
    %97 = arith.addf %95, %96 : vector<8x128xf32>
    %98 = arith.mulf %85, %97 : vector<8x128xf32>
    %99 = arith.addf %94, %98 : vector<8x128xf32>
    %100 = math.tanh %99 : vector<8x128xf32>
    %101 = arith.subf %69, %100 : vector<8x128xf32>
    %102 = arith.mulf %93, %101 : vector<8x128xf32>
    %103 = arith.addf %100, %102 : vector<8x128xf32>
    %104 = arith.index_cast %c2_i32 : i32 to index
    %c0_25 = arith.constant 0 : index
    %c0_26 = arith.constant 0 : index
    %105 = vector.load %arg5[%104, %c0_25, %c0_26] : memref<8x8x128xf32, #tpu.memory_space<vmem>>, vector<1x8x128xf32>
    %106 = vector.shape_cast %105 : vector<1x8x128xf32> to vector<8x128xf32>
    %107 = vector.shape_cast %103 : vector<8x128xf32> to vector<1x8x128xf32>
    tpu.vector_store %arg5[%104, %c0_25, %c0_26], %107 {strides = array<i32>} : memref<8x8x128xf32, #tpu.memory_space<vmem>>, vector<1x8x128xf32>,
    %c3_i32 = arith.constant 3 : i32
    %108 = arith.index_cast %c3_i32 : i32 to index
    %c0_27 = arith.constant 0 : index
    %c0_28 = arith.constant 0 : index
    %109 = vector.load %arg1[%108, %c0_27, %c0_28] : memref<8x8x384xf32, #tpu.memory_space<vmem>>, vector<1x8x384xf32>
    %110 = vector.shape_cast %109 : vector<1x8x384xf32> to vector<8x384xf32>
    %cst_29 = arith.constant dense<0.000000e+00> : vector<8x384xf32>
    %111 = tpu.matmul %103, %3, %cst_29 {dimension_numbers = #tpu.dot_dimension_numbers<[1], [0], [0], [1], [0, 0, 1, 1], [], []>} : vector<8x128xf32>, vector<128x384xf32>, vector<8x384xf32> -> vector<8x384xf32>
    %112 = vector.extract_strided_slice %110 {offsets = [0, 0], sizes = [8, 128], strides = [1, 1]} : vector<8x384xf32> to vector<8x128xf32>
    %113 = vector.extract_strided_slice %111 {offsets = [0, 0], sizes = [8, 128], strides = [1, 1]} : vector<8x384xf32> to vector<8x128xf32>
    %114 = arith.addf %112, %113 : vector<8x128xf32>
    %115 = arith.negf %114 : vector<8x128xf32>
    %116 = math.exp %115 : vector<8x128xf32>
    %cst_30 = arith.constant 1.000000e+00 : f32
    %117 = vector.broadcast %cst_30 : f32 to vector<8x128xf32>
    %118 = arith.addf %117, %116 : vector<8x128xf32>
    %119 = arith.divf %117, %118 : vector<8x128xf32>
    %120 = vector.extract_strided_slice %110 {offsets = [0, 128], sizes = [8, 128], strides = [1, 1]} : vector<8x384xf32> to vector<8x128xf32>
    %121 = vector.extract_strided_slice %111 {offsets = [0, 128], sizes = [8, 128], strides = [1, 1]} : vector<8x384xf32> to vector<8x128xf32>
    %122 = arith.addf %120, %121 : vector<8x128xf32>
    %123 = arith.negf %122 : vector<8x128xf32>
    %124 = math.exp %123 : vector<8x128xf32>
    %cst_31 = arith.constant 1.000000e+00 : f32
    %125 = vector.broadcast %cst_31 : f32 to vector<8x128xf32>
    %126 = arith.addf %125, %124 : vector<8x128xf32>
    %127 = arith.divf %125, %126 : vector<8x128xf32>
    %128 = vector.extract_strided_slice %110 {offsets = [0, 256], sizes = [8, 128], strides = [1, 1]} : vector<8x384xf32> to vector<8x128xf32>
    %129 = vector.extract_strided_slice %111 {offsets = [0, 256], sizes = [8, 128], strides = [1, 1]} : vector<8x384xf32> to vector<8x128xf32>
    %130 = vector.broadcast %4 : vector<1x128xf32> to vector<8x128xf32>
    %131 = arith.addf %129, %130 : vector<8x128xf32>
    %132 = arith.mulf %119, %131 : vector<8x128xf32>
    %133 = arith.addf %128, %132 : vector<8x128xf32>
    %134 = math.tanh %133 : vector<8x128xf32>
    %135 = arith.subf %103, %134 : vector<8x128xf32>
    %136 = arith.mulf %127, %135 : vector<8x128xf32>
    %137 = arith.addf %134, %136 : vector<8x128xf32>
    %138 = arith.index_cast %c3_i32 : i32 to index
    %c0_32 = arith.constant 0 : index
    %c0_33 = arith.constant 0 : index
    %139 = vector.load %arg5[%138, %c0_32, %c0_33] : memref<8x8x128xf32, #tpu.memory_space<vmem>>, vector<1x8x128xf32>
    %140 = vector.shape_cast %139 : vector<1x8x128xf32> to vector<8x128xf32>
    %141 = vector.shape_cast %137 : vector<8x128xf32> to vector<1x8x128xf32>
    tpu.vector_store %arg5[%138, %c0_32, %c0_33], %141 {strides = array<i32>} : memref<8x8x128xf32, #tpu.memory_space<vmem>>, vector<1x8x128xf32>,
    %c4_i32 = arith.constant 4 : i32
    %142 = arith.index_cast %c4_i32 : i32 to index
    %c0_34 = arith.constant 0 : index
    %c0_35 = arith.constant 0 : index
    %143 = vector.load %arg1[%142, %c0_34, %c0_35] : memref<8x8x384xf32, #tpu.memory_space<vmem>>, vector<1x8x384xf32>
    %144 = vector.shape_cast %143 : vector<1x8x384xf32> to vector<8x384xf32>
    %cst_36 = arith.constant dense<0.000000e+00> : vector<8x384xf32>
    %145 = tpu.matmul %137, %3, %cst_36 {dimension_numbers = #tpu.dot_dimension_numbers<[1], [0], [0], [1], [0, 0, 1, 1], [], []>} : vector<8x128xf32>, vector<128x384xf32>, vector<8x384xf32> -> vector<8x384xf32>
    %146 = vector.extract_strided_slice %144 {offsets = [0, 0], sizes = [8, 128], strides = [1, 1]} : vector<8x384xf32> to vector<8x128xf32>
    %147 = vector.extract_strided_slice %145 {offsets = [0, 0], sizes = [8, 128], strides = [1, 1]} : vector<8x384xf32> to vector<8x128xf32>
    %148 = arith.addf %146, %147 : vector<8x128xf32>
    %149 = arith.negf %148 : vector<8x128xf32>
    %150 = math.exp %149 : vector<8x128xf32>
    %cst_37 = arith.constant 1.000000e+00 : f32
    %151 = vector.broadcast %cst_37 : f32 to vector<8x128xf32>
    %152 = arith.addf %151, %150 : vector<8x128xf32>
    %153 = arith.divf %151, %152 : vector<8x128xf32>
    %154 = vector.extract_strided_slice %144 {offsets = [0, 128], sizes = [8, 128], strides = [1, 1]} : vector<8x384xf32> to vector<8x128xf32>
    %155 = vector.extract_strided_slice %145 {offsets = [0, 128], sizes = [8, 128], strides = [1, 1]} : vector<8x384xf32> to vector<8x128xf32>
    %156 = arith.addf %154, %155 : vector<8x128xf32>
    %157 = arith.negf %156 : vector<8x128xf32>
    %158 = math.exp %157 : vector<8x128xf32>
    %cst_38 = arith.constant 1.000000e+00 : f32
    %159 = vector.broadcast %cst_38 : f32 to vector<8x128xf32>
    %160 = arith.addf %159, %158 : vector<8x128xf32>
    %161 = arith.divf %159, %160 : vector<8x128xf32>
    %162 = vector.extract_strided_slice %144 {offsets = [0, 256], sizes = [8, 128], strides = [1, 1]} : vector<8x384xf32> to vector<8x128xf32>
    %163 = vector.extract_strided_slice %145 {offsets = [0, 256], sizes = [8, 128], strides = [1, 1]} : vector<8x384xf32> to vector<8x128xf32>
    %164 = vector.broadcast %4 : vector<1x128xf32> to vector<8x128xf32>
    %165 = arith.addf %163, %164 : vector<8x128xf32>
    %166 = arith.mulf %153, %165 : vector<8x128xf32>
    %167 = arith.addf %162, %166 : vector<8x128xf32>
    %168 = math.tanh %167 : vector<8x128xf32>
    %169 = arith.subf %137, %168 : vector<8x128xf32>
    %170 = arith.mulf %161, %169 : vector<8x128xf32>
    %171 = arith.addf %168, %170 : vector<8x128xf32>
    %172 = arith.index_cast %c4_i32 : i32 to index
    %c0_39 = arith.constant 0 : index
    %c0_40 = arith.constant 0 : index
    %173 = vector.load %arg5[%172, %c0_39, %c0_40] : memref<8x8x128xf32, #tpu.memory_space<vmem>>, vector<1x8x128xf32>
    %174 = vector.shape_cast %173 : vector<1x8x128xf32> to vector<8x128xf32>
    %175 = vector.shape_cast %171 : vector<8x128xf32> to vector<1x8x128xf32>
    tpu.vector_store %arg5[%172, %c0_39, %c0_40], %175 {strides = array<i32>} : memref<8x8x128xf32, #tpu.memory_space<vmem>>, vector<1x8x128xf32>,
    %c5_i32 = arith.constant 5 : i32
    %176 = arith.index_cast %c5_i32 : i32 to index
    %c0_41 = arith.constant 0 : index
    %c0_42 = arith.constant 0 : index
    %177 = vector.load %arg1[%176, %c0_41, %c0_42] : memref<8x8x384xf32, #tpu.memory_space<vmem>>, vector<1x8x384xf32>
    %178 = vector.shape_cast %177 : vector<1x8x384xf32> to vector<8x384xf32>
    %cst_43 = arith.constant dense<0.000000e+00> : vector<8x384xf32>
    %179 = tpu.matmul %171, %3, %cst_43 {dimension_numbers = #tpu.dot_dimension_numbers<[1], [0], [0], [1], [0, 0, 1, 1], [], []>} : vector<8x128xf32>, vector<128x384xf32>, vector<8x384xf32> -> vector<8x384xf32>
    %180 = vector.extract_strided_slice %178 {offsets = [0, 0], sizes = [8, 128], strides = [1, 1]} : vector<8x384xf32> to vector<8x128xf32>
    %181 = vector.extract_strided_slice %179 {offsets = [0, 0], sizes = [8, 128], strides = [1, 1]} : vector<8x384xf32> to vector<8x128xf32>
    %182 = arith.addf %180, %181 : vector<8x128xf32>
    %183 = arith.negf %182 : vector<8x128xf32>
    %184 = math.exp %183 : vector<8x128xf32>
    %cst_44 = arith.constant 1.000000e+00 : f32
    %185 = vector.broadcast %cst_44 : f32 to vector<8x128xf32>
    %186 = arith.addf %185, %184 : vector<8x128xf32>
    %187 = arith.divf %185, %186 : vector<8x128xf32>
    %188 = vector.extract_strided_slice %178 {offsets = [0, 128], sizes = [8, 128], strides = [1, 1]} : vector<8x384xf32> to vector<8x128xf32>
    %189 = vector.extract_strided_slice %179 {offsets = [0, 128], sizes = [8, 128], strides = [1, 1]} : vector<8x384xf32> to vector<8x128xf32>
    %190 = arith.addf %188, %189 : vector<8x128xf32>
    %191 = arith.negf %190 : vector<8x128xf32>
    %192 = math.exp %191 : vector<8x128xf32>
    %cst_45 = arith.constant 1.000000e+00 : f32
    %193 = vector.broadcast %cst_45 : f32 to vector<8x128xf32>
    %194 = arith.addf %193, %192 : vector<8x128xf32>
    %195 = arith.divf %193, %194 : vector<8x128xf32>
    %196 = vector.extract_strided_slice %178 {offsets = [0, 256], sizes = [8, 128], strides = [1, 1]} : vector<8x384xf32> to vector<8x128xf32>
    %197 = vector.extract_strided_slice %179 {offsets = [0, 256], sizes = [8, 128], strides = [1, 1]} : vector<8x384xf32> to vector<8x128xf32>
    %198 = vector.broadcast %4 : vector<1x128xf32> to vector<8x128xf32>
    %199 = arith.addf %197, %198 : vector<8x128xf32>
    %200 = arith.mulf %187, %199 : vector<8x128xf32>
    %201 = arith.addf %196, %200 : vector<8x128xf32>
    %202 = math.tanh %201 : vector<8x128xf32>
    %203 = arith.subf %171, %202 : vector<8x128xf32>
    %204 = arith.mulf %195, %203 : vector<8x128xf32>
    %205 = arith.addf %202, %204 : vector<8x128xf32>
    %206 = arith.index_cast %c5_i32 : i32 to index
    %c0_46 = arith.constant 0 : index
    %c0_47 = arith.constant 0 : index
    %207 = vector.load %arg5[%206, %c0_46, %c0_47] : memref<8x8x128xf32, #tpu.memory_space<vmem>>, vector<1x8x128xf32>
    %208 = vector.shape_cast %207 : vector<1x8x128xf32> to vector<8x128xf32>
    %209 = vector.shape_cast %205 : vector<8x128xf32> to vector<1x8x128xf32>
    tpu.vector_store %arg5[%206, %c0_46, %c0_47], %209 {strides = array<i32>} : memref<8x8x128xf32, #tpu.memory_space<vmem>>, vector<1x8x128xf32>,
    %c6_i32 = arith.constant 6 : i32
    %210 = arith.index_cast %c6_i32 : i32 to index
    %c0_48 = arith.constant 0 : index
    %c0_49 = arith.constant 0 : index
    %211 = vector.load %arg1[%210, %c0_48, %c0_49] : memref<8x8x384xf32, #tpu.memory_space<vmem>>, vector<1x8x384xf32>
    %212 = vector.shape_cast %211 : vector<1x8x384xf32> to vector<8x384xf32>
    %cst_50 = arith.constant dense<0.000000e+00> : vector<8x384xf32>
    %213 = tpu.matmul %205, %3, %cst_50 {dimension_numbers = #tpu.dot_dimension_numbers<[1], [0], [0], [1], [0, 0, 1, 1], [], []>} : vector<8x128xf32>, vector<128x384xf32>, vector<8x384xf32> -> vector<8x384xf32>
    %214 = vector.extract_strided_slice %212 {offsets = [0, 0], sizes = [8, 128], strides = [1, 1]} : vector<8x384xf32> to vector<8x128xf32>
    %215 = vector.extract_strided_slice %213 {offsets = [0, 0], sizes = [8, 128], strides = [1, 1]} : vector<8x384xf32> to vector<8x128xf32>
    %216 = arith.addf %214, %215 : vector<8x128xf32>
    %217 = arith.negf %216 : vector<8x128xf32>
    %218 = math.exp %217 : vector<8x128xf32>
    %cst_51 = arith.constant 1.000000e+00 : f32
    %219 = vector.broadcast %cst_51 : f32 to vector<8x128xf32>
    %220 = arith.addf %219, %218 : vector<8x128xf32>
    %221 = arith.divf %219, %220 : vector<8x128xf32>
    %222 = vector.extract_strided_slice %212 {offsets = [0, 128], sizes = [8, 128], strides = [1, 1]} : vector<8x384xf32> to vector<8x128xf32>
    %223 = vector.extract_strided_slice %213 {offsets = [0, 128], sizes = [8, 128], strides = [1, 1]} : vector<8x384xf32> to vector<8x128xf32>
    %224 = arith.addf %222, %223 : vector<8x128xf32>
    %225 = arith.negf %224 : vector<8x128xf32>
    %226 = math.exp %225 : vector<8x128xf32>
    %cst_52 = arith.constant 1.000000e+00 : f32
    %227 = vector.broadcast %cst_52 : f32 to vector<8x128xf32>
    %228 = arith.addf %227, %226 : vector<8x128xf32>
    %229 = arith.divf %227, %228 : vector<8x128xf32>
    %230 = vector.extract_strided_slice %212 {offsets = [0, 256], sizes = [8, 128], strides = [1, 1]} : vector<8x384xf32> to vector<8x128xf32>
    %231 = vector.extract_strided_slice %213 {offsets = [0, 256], sizes = [8, 128], strides = [1, 1]} : vector<8x384xf32> to vector<8x128xf32>
    %232 = vector.broadcast %4 : vector<1x128xf32> to vector<8x128xf32>
    %233 = arith.addf %231, %232 : vector<8x128xf32>
    %234 = arith.mulf %221, %233 : vector<8x128xf32>
    %235 = arith.addf %230, %234 : vector<8x128xf32>
    %236 = math.tanh %235 : vector<8x128xf32>
    %237 = arith.subf %205, %236 : vector<8x128xf32>
    %238 = arith.mulf %229, %237 : vector<8x128xf32>
    %239 = arith.addf %236, %238 : vector<8x128xf32>
    %240 = arith.index_cast %c6_i32 : i32 to index
    %c0_53 = arith.constant 0 : index
    %c0_54 = arith.constant 0 : index
    %241 = vector.load %arg5[%240, %c0_53, %c0_54] : memref<8x8x128xf32, #tpu.memory_space<vmem>>, vector<1x8x128xf32>
    %242 = vector.shape_cast %241 : vector<1x8x128xf32> to vector<8x128xf32>
    %243 = vector.shape_cast %239 : vector<8x128xf32> to vector<1x8x128xf32>
    tpu.vector_store %arg5[%240, %c0_53, %c0_54], %243 {strides = array<i32>} : memref<8x8x128xf32, #tpu.memory_space<vmem>>, vector<1x8x128xf32>,
    %c7_i32 = arith.constant 7 : i32
    %244 = arith.index_cast %c7_i32 : i32 to index
    %c0_55 = arith.constant 0 : index
    %c0_56 = arith.constant 0 : index
    %245 = vector.load %arg1[%244, %c0_55, %c0_56] : memref<8x8x384xf32, #tpu.memory_space<vmem>>, vector<1x8x384xf32>
    %246 = vector.shape_cast %245 : vector<1x8x384xf32> to vector<8x384xf32>
    %cst_57 = arith.constant dense<0.000000e+00> : vector<8x384xf32>
    %247 = tpu.matmul %239, %3, %cst_57 {dimension_numbers = #tpu.dot_dimension_numbers<[1], [0], [0], [1], [0, 0, 1, 1], [], []>} : vector<8x128xf32>, vector<128x384xf32>, vector<8x384xf32> -> vector<8x384xf32>
    %248 = vector.extract_strided_slice %246 {offsets = [0, 0], sizes = [8, 128], strides = [1, 1]} : vector<8x384xf32> to vector<8x128xf32>
    %249 = vector.extract_strided_slice %247 {offsets = [0, 0], sizes = [8, 128], strides = [1, 1]} : vector<8x384xf32> to vector<8x128xf32>
    %250 = arith.addf %248, %249 : vector<8x128xf32>
    %251 = arith.negf %250 : vector<8x128xf32>
    %252 = math.exp %251 : vector<8x128xf32>
    %cst_58 = arith.constant 1.000000e+00 : f32
    %253 = vector.broadcast %cst_58 : f32 to vector<8x128xf32>
    %254 = arith.addf %253, %252 : vector<8x128xf32>
    %255 = arith.divf %253, %254 : vector<8x128xf32>
    %256 = vector.extract_strided_slice %246 {offsets = [0, 128], sizes = [8, 128], strides = [1, 1]} : vector<8x384xf32> to vector<8x128xf32>
    %257 = vector.extract_strided_slice %247 {offsets = [0, 128], sizes = [8, 128], strides = [1, 1]} : vector<8x384xf32> to vector<8x128xf32>
    %258 = arith.addf %256, %257 : vector<8x128xf32>
    %259 = arith.negf %258 : vector<8x128xf32>
    %260 = math.exp %259 : vector<8x128xf32>
    %cst_59 = arith.constant 1.000000e+00 : f32
    %261 = vector.broadcast %cst_59 : f32 to vector<8x128xf32>
    %262 = arith.addf %261, %260 : vector<8x128xf32>
    %263 = arith.divf %261, %262 : vector<8x128xf32>
    %264 = vector.extract_strided_slice %246 {offsets = [0, 256], sizes = [8, 128], strides = [1, 1]} : vector<8x384xf32> to vector<8x128xf32>
    %265 = vector.extract_strided_slice %247 {offsets = [0, 256], sizes = [8, 128], strides = [1, 1]} : vector<8x384xf32> to vector<8x128xf32>
    %266 = vector.broadcast %4 : vector<1x128xf32> to vector<8x128xf32>
    %267 = arith.addf %265, %266 : vector<8x128xf32>
    %268 = arith.mulf %255, %267 : vector<8x128xf32>
    %269 = arith.addf %264, %268 : vector<8x128xf32>
    %270 = math.tanh %269 : vector<8x128xf32>
    %271 = arith.subf %239, %270 : vector<8x128xf32>
    %272 = arith.mulf %263, %271 : vector<8x128xf32>
    %273 = arith.addf %270, %272 : vector<8x128xf32>
    %274 = arith.index_cast %c7_i32 : i32 to index
    %c0_60 = arith.constant 0 : index
    %c0_61 = arith.constant 0 : index
    %275 = vector.load %arg5[%274, %c0_60, %c0_61] : memref<8x8x128xf32, #tpu.memory_space<vmem>>, vector<1x8x128xf32>
    %276 = vector.shape_cast %275 : vector<1x8x128xf32> to vector<8x128xf32>
    %277 = vector.shape_cast %273 : vector<8x128xf32> to vector<1x8x128xf32>
    tpu.vector_store %arg5[%274, %c0_60, %c0_61], %277 {strides = array<i32>} : memref<8x8x128xf32, #tpu.memory_space<vmem>>, vector<1x8x128xf32>,
    %c8_i32 = arith.constant 8 : i32
    %c0_62 = arith.constant 0 : index
    %c0_63 = arith.constant 0 : index
    %278 = vector.load %arg6[%c0_62, %c0_63] : memref<8x128xf32, #tpu.memory_space<vmem>>, vector<8x128xf32>
    tpu.vector_store %arg6[%c0_62, %c0_63], %273 {strides = array<i32>} : memref<8x128xf32, #tpu.memory_space<vmem>>, vector<8x128xf32>,
    return
  }
  func.func @transform_0(%arg0: i32) -> (i32, i32, i32) {
    %c0_i32 = arith.constant 0 : i32
    %c0_i32_0 = arith.constant 0 : i32
    %c0_i32_1 = arith.constant 0 : i32
    return %arg0, %c0_i32, %c0_i32_0 : i32, i32, i32
  }
  func.func @transform_1(%arg0: i32) -> (i32, i32) {
    %c0_i32 = arith.constant 0 : i32
    %c0_i32_0 = arith.constant 0 : i32
    %c0_i32_1 = arith.constant 0 : i32
    return %c0_i32, %c0_i32_0 : i32, i32
  }
  func.func @transform_2(%arg0: i32) -> (i32, i32) {
    %c0_i32 = arith.constant 0 : i32
    %c0_i32_0 = arith.constant 0 : i32
    %c0_i32_1 = arith.constant 0 : i32
    return %c0_i32, %c0_i32_0 : i32, i32
  }
  func.func @transform_3(%arg0: i32) -> (i32, i32) {
    %c0_i32 = arith.constant 0 : i32
    %c0_i32_0 = arith.constant 0 : i32
    %c0_i32_1 = arith.constant 0 : i32
    return %c0_i32, %c0_i32_0 : i32, i32
  }
  func.func @transform_4(%arg0: i32) -> (i32, i32, i32) {
    %c0_i32 = arith.constant 0 : i32
    %c0_i32_0 = arith.constant 0 : i32
    %c0_i32_1 = arith.constant 0 : i32
    return %arg0, %c0_i32, %c0_i32_0 : i32, i32, i32
  }
}

</mosaic_0001>

<llo_original>
// kernel: a_call__.1
$region0: #{a_call__.1}
  #allocation0 [shape = 'u32[]', space=smem, size = 0x4, offset = 0x4, fixed_abs, tag = 'smem constant byte address 0x4 - core index']
  #allocation1 [shape = 'u32[144,128]{1,0:T(1,128)}', space=vmem, size = 0x12000, scoped, tag = 'internal scratch']
  #allocation2 [shape = 'f32[8,128]{1,0:T(8,128)}', space=vmem, size = 0x1000, scoped, tag = 'scratch operand']
  %s0 = inlined_call_operand.vmem [shape: f32[8,8,384], index: 0, kind: input, shape index: {}]
  %s1 = inlined_call_operand.vmem [shape: f32[8,128], index: 1, kind: input, shape index: {}]
  %s2 = inlined_call_operand.vmem [shape: f32[128,384], index: 2, kind: input, shape index: {}]
  %s3 = inlined_call_operand.vmem [shape: f32[1,128], index: 3, kind: input, shape index: {}]
  %s4 = inlined_call_operand.vmem [shape: f32[8,8,128], index: 4, kind: output, shape index: {}]
  %s5 = sld [smem:[#allocation0]]
  $region30: #{a_call__.1} parent=0
    _
  %s7 = ssub.s32 1, %s5
  %s8 = scalar_select 0, %s7, %s5
  // Predicated region
  $region2: #{a_call__.1} parent=0 // pred_check
    _
  $region3: #{a_call__.1} parent=0 // pred_check_branch
    %10 = sbr.rel (0) target = $region5
  $region4: #{a_call__.1} parent=0 // pred_region
    _
  $region5: #{a_call__.1} parent=0 // pred_fallthru
    _
  // Predicated region
  $region6: #{a_call__.1} parent=0 // pred_check
    _
  $region7: #{a_call__.1} parent=0 // pred_check_branch
    %12 = sbr.rel (0) target = $region9
  $region8: #{a_call__.1} parent=0 // pred_region
    _
  $region9: #{a_call__.1} parent=0 // pred_fallthru
    _
  // Predicated region
  $region10: #{a_call__.1} parent=0 // pred_check
    _
  $region11: #{a_call__.1} parent=0 // pred_check_branch
    %14 = sbr.rel (0) target = $region13
  $region12: #{a_call__.1} parent=0 // pred_region
    _
  $region13: #{a_call__.1} parent=0 // pred_fallthru
    _
  // Predicated region
  $region14: #{a_call__.1} parent=0 // pred_check
    _
  $region15: #{a_call__.1} parent=0 // pred_check_branch
    %16 = sbr.rel (0) target = $region17
  $region16: #{a_call__.1} parent=0 // pred_region
    _
  $region17: #{a_call__.1} parent=0 // pred_fallthru
    _
  %p17 = scmp.eq.s32.totalorder 0, 0
  // Predicated region
  $region18: #{a_call__.1} parent=0 // pred_check
    %p18 = pneg %p17
  $region19: #{a_call__.1} parent=0 // pred_check_branch
    %20 = sbr.rel (%p18) target = $region21
  $region20: #{a_call__.1} parent=0 // pred_region
    %v21 = vld [vmem:[%s1] sm:$0xff]
    %22 = vst [vmem:[#allocation2] sm:$0xff] %v21
  $region21: #{a_call__.1} parent=0 // pred_fallthru
    _
  %v23 = vld [vmem:[%s2] sm:$0xff]
  %v24 = vld [vmem:[%s2 + $0x8] sm:$0xff]
  %v25 = vld [vmem:[%s2 + $0x10] sm:$0xff]
  %v26 = vld [vmem:[%s2 + $0x18] sm:$0xff]
  %v27 = vld [vmem:[%s2 + $0x20] sm:$0xff]
  %v28 = vld [vmem:[%s2 + $0x28] sm:$0xff]
  %v29 = vld [vmem:[%s2 + $0x30] sm:$0xff]
  %v30 = vld [vmem:[%s2 + $0x38] sm:$0xff]
  %v31 = vld [vmem:[%s2 + $0x40] sm:$0xff]
  %v32 = vld [vmem:[%s2 + $0x48] sm:$0xff]
  %v33 = vld [vmem:[%s2 + $0x50] sm:$0xff]
  %v34 = vld [vmem:[%s2 + $0x58] sm:$0xff]
  %v35 = vld [vmem:[%s2 + $0x60] sm:$0xff]
  %v36 = vld [vmem:[%s2 + $0x68] sm:$0xff]
  %v37 = vld [vmem:[%s2 + $0x70] sm:$0xff]
  %v38 = vld [vmem:[%s2 + $0x78] sm:$0xff]
  %v39 = vld [vmem:[%s2 + $0x80] sm:$0xff]
  %v40 = vld [vmem:[%s2 + $0x88] sm:$0xff]
  %v41 = vld [vmem:[%s2 + $0x90] sm:$0xff]
  %v42 = vld [vmem:[%s2 + $0x98] sm:$0xff]
  %v43 = vld [vmem:[%s2 + $0xa0] sm:$0xff]
  %v44 = vld [vmem:[%s2 + $0xa8] sm:$0xff]
  %v45 = vld [vmem:[%s2 + $0xb0] sm:$0xff]
  %v46 = vld [vmem:[%s2 + $0xb8] sm:$0xff]
  %v47 = vld [vmem:[%s2 + $0xc0] sm:$0xff]
  %v48 = vld [vmem:[%s2 + $0xc8] sm:$0xff]
  %v49 = vld [vmem:[%s2 + $0xd0] sm:$0xff]
  %v50 = vld [vmem:[%s2 + $0xd8] sm:$0xff]
  %v51 = vld [vmem:[%s2 + $0xe0] sm:$0xff]
  %v52 = vld [vmem:[%s2 + $0xe8] sm:$0xff]
  %v53 = vld [vmem:[%s2 + $0xf0] sm:$0xff]
  %v54 = vld [vmem:[%s2 + $0xf8] sm:$0xff]
  %v55 = vld [vmem:[%s2 + $0x100] sm:$0xff]
  %v56 = vld [vmem:[%s2 + $0x108] sm:$0xff]
  %v57 = vld [vmem:[%s2 + $0x110] sm:$0xff]
  %v58 = vld [vmem:[%s2 + $0x118] sm:$0xff]
  %v59 = vld [vmem:[%s2 + $0x120] sm:$0xff]
  %v60 = vld [vmem:[%s2 + $0x128] sm:$0xff]
  %v61 = vld [vmem:[%s2 + $0x130] sm:$0xff]
  %v62 = vld [vmem:[%s2 + $0x138] sm:$0xff]
  %v63 = vld [vmem:[%s2 + $0x140] sm:$0xff]
  %v64 = vld [vmem:[%s2 + $0x148] sm:$0xff]
  %v65 = vld [vmem:[%s2 + $0x150] sm:$0xff]
  %v66 = vld [vmem:[%s2 + $0x158] sm:$0xff]
  %v67 = vld [vmem:[%s2 + $0x160] sm:$0xff]
  %v68 = vld [vmem:[%s2 + $0x168] sm:$0xff]
  %v69 = vld [vmem:[%s2 + $0x170] sm:$0xff]
  %v70 = vld [vmem:[%s2 + $0x178] sm:$0xff]
  %v71 = vld [vmem:[%s3] sm:$0x1]
  %v72 = vld [vmem:[#allocation2] sm:$0xff]
  %v73 = vld [vmem:[%s0] sm:$0xff]
  %v74 = vld [vmem:[%s0 + $0x8] sm:$0xff]
  %v75 = vld [vmem:[%s0 + $0x10] sm:$0xff]
  %76 = vmatprep.subr.mxu0 %v69
  %77 = vmatpush1.msra.mxu0 %v68
  %78 = vmatprep.subr.mxu0 %v66
  %79 = vmatpush1.msra.mxu0 %v65
  %80 = vmatprep.subr.mxu0 %v63
  %81 = vmatpush1.msra.mxu0 %v62
  %82 = vmatprep.subr.mxu0 %v60
  %83 = vmatpush1.msra.mxu0 %v59
  %84 = vmatprep.subr.mxu0 %v57
  %85 = vmatpush1.msra.mxu0 %v56
  %86 = vmatprep.subr.mxu0 %v54
  %87 = vmatpush1.msra.mxu0 %v53
  %88 = vmatprep.subr.mxu0 %v51
  %89 = vmatpush1.msra.mxu0 %v50
  %90 = vmatprep.subr.mxu0 %v48
  %91 = vmatpush1.msra.mxu0 %v47
  %92 = vmatprep.subr.mxu0 %v45
  %93 = vmatpush1.msra.mxu0 %v44
  %94 = vmatprep.subr.mxu0 %v42
  %95 = vmatpush1.msra.mxu0 %v41
  %96 = vmatprep.subr.mxu0 %v39
  %97 = vmatpush1.msra.mxu0 %v38
  %98 = vmatprep.subr.mxu0 %v36
  %99 = vmatpush1.msra.mxu0 %v35
  %100 = vmatprep.subr.mxu0 %v33
  %101 = vmatpush1.msra.mxu0 %v32
  %102 = vmatprep.subr.mxu0 %v30
  %103 = vmatpush1.msra.mxu0 %v29
  %104 = vmatprep.subr.mxu0 %v27
  %105 = vmatpush1.msra.mxu0 %v26
  %106 = vmatprep.subr.mxu0 %v24
  %107 = vmatpush1.msra.mxu0 %v23
  %108 = vmatprep.subr.mxu0 0.0
  %109 = vmatpush2.msra.mxu0 0.0
  %110 = vmatprep.subr.mxu0 0.0
  %111 = vmatpush2.msra.mxu0 0.0
  %112 = vmatprep.subr.mxu0 0.0
  %113 = vmatpush2.msra.mxu0 0.0
  %114 = vmatprep.subr.mxu0 0.0
  %115 = vmatpush2.msra.mxu0 0.0
  %116 = vmatprep.subr.mxu0 0.0
  %117 = vmatpush2.msra.mxu0 0.0
  %118 = vmatprep.subr.mxu0 0.0
  %119 = vmatpush2.msra.mxu0 0.0
  %120 = vmatprep.subr.mxu0 0.0
  %121 = vmatpush2.msra.mxu0 0.0
  %122 = vmatprep.subr.mxu0 0.0
  %123 = vmatpush2.msra.mxu0 0.0
  %124 = vmatprep.subr.mxu0 0.0
  %125 = vmatpush2.msra.mxu0 0.0
  %126 = vmatprep.subr.mxu0 0.0
  %127 = vmatpush2.msra.mxu0 0.0
  %128 = vmatprep.subr.mxu0 0.0
  %129 = vmatpush2.msra.mxu0 0.0
  %130 = vmatprep.subr.mxu0 0.0
  %131 = vmatpush2.msra.mxu0 0.0
  %132 = vmatprep.subr.mxu0 0.0
  %133 = vmatpush2.msra.mxu0 0.0
  %134 = vmatprep.subr.mxu0 0.0
  %135 = vmatpush2.msra.mxu0 0.0
  %136 = vmatprep.subr.mxu0 0.0
  %137 = vmatpush2.msra.mxu0 0.0
  %138 = vmatprep.subr.mxu0 0.0
  %139 = vmatpush2.msra.mxu0 0.0
  %140 = vmatprep.mubr.f32.mxu0 0.0
  %141 = vmatmul.mubr.f32.gmra.mxu0 %v72
  %v142 = vpop.f32.mrf.mxu0
  %v143 = vadd.f32 0.0, %v142
  %v144 = vpop.f32.mrf.mxu0
  %v145 = vadd.f32 0.0, %v144
  %146 = vdwg.mxu0
  %147 = vmatprep.subr.mxu0 0.0
  %148 = vmatpush1.msra.mxu0 %v70
  %149 = vmatprep.subr.mxu0 0.0
  %150 = vmatpush1.msra.mxu0 %v67
  %151 = vmatprep.subr.mxu0 0.0
  %152 = vmatpush1.msra.mxu0 %v64
  %153 = vmatprep.subr.mxu0 0.0
  %154 = vmatpush1.msra.mxu0 %v61
  %155 = vmatprep.subr.mxu0 0.0
  %156 = vmatpush1.msra.mxu0 %v58
  %157 = vmatprep.subr.mxu0 0.0
  %158 = vmatpush1.msra.mxu0 %v55
  %159 = vmatprep.subr.mxu0 0.0
  %160 = vmatpush1.msra.mxu0 %v52
  %161 = vmatprep.subr.mxu0 0.0
  %162 = vmatpush1.msra.mxu0 %v49
  %163 = vmatprep.subr.mxu0 0.0
  %164 = vmatpush1.msra.mxu0 %v46
  %165 = vmatprep.subr.mxu0 0.0
  %166 = vmatpush1.msra.mxu0 %v43
  %167 = vmatprep.subr.mxu0 0.0
  %168 = vmatpush1.msra.mxu0 %v40
  %169 = vmatprep.subr.mxu0 0.0
  %170 = vmatpush1.msra.mxu0 %v37
  %171 = vmatprep.subr.mxu0 0.0
  %172 = vmatpush1.msra.mxu0 %v34
  %173 = vmatprep.subr.mxu0 0.0
  %174 = vmatpush1.msra.mxu0 %v31
  %175 = vmatprep.subr.mxu0 0.0
  %176 = vmatpush1.msra.mxu0 %v28
  %177 = vmatprep.subr.mxu0 0.0
  %178 = vmatpush1.msra.mxu0 %v25
  %179 = vmatprep.subr.mxu0 0.0
  %180 = vmatpush2.msra.mxu0 0.0
  %181 = vmatprep.subr.mxu0 0.0
  %182 = vmatpush2.msra.mxu0 0.0
  %183 = vmatprep.subr.mxu0 0.0
  %184 = vmatpush2.msra.mxu0 0.0
  %185 = vmatprep.subr.mxu0 0.0
  %186 = vmatpush2.msra.mxu0 0.0
  %187 = vmatprep.subr.mxu0 0.0
  %188 = vmatpush2.msra.mxu0 0.0
  %189 = vmatprep.subr.mxu0 0.0
  %190 = vmatpush2.msra.mxu0 0.0
  %191 = vmatprep.subr.mxu0 0.0
  %192 = vmatpush2.msra.mxu0 0.0
  %193 = vmatprep.subr.mxu0 0.0
  %194 = vmatpush2.msra.mxu0 0.0
  %195 = vmatprep.subr.mxu0 0.0
  %196 = vmatpush2.msra.mxu0 0.0
  %197 = vmatprep.subr.mxu0 0.0
  %198 = vmatpush2.msra.mxu0 0.0
  %199 = vmatprep.subr.mxu0 0.0
  %200 = vmatpush2.msra.mxu0 0.0
  %201 = vmatprep.subr.mxu0 0.0
  %202 = vmatpush2.msra.mxu0 0.0
  %203 = vmatprep.subr.mxu0 0.0
  %204 = vmatpush2.msra.mxu0 0.0
  %205 = vmatprep.subr.mxu0 0.0
  %206 = vmatpush2.msra.mxu0 0.0
  %207 = vmatprep.subr.mxu0 0.0
  %208 = vmatpush2.msra.mxu0 0.0
  %209 = vmatprep.subr.mxu0 0.0
  %210 = vmatpush2.msra.mxu0 0.0
  %211 = vmatprep.mubr.f32.mxu0 0.0
  %212 = vmatmul.mubr.f32.gmra.mxu0 %v72
  %v213 = vpop.f32.mrf.mxu0
  %v214 = vadd.f32 0.0, %v213
  %v215 = vpop.f32.mrf.mxu0
  %216 = vdwg.mxu0
  %v217 = vadd.f32 %v73, %v143
  %v218 = vxor.u32 %v217, 2147483648
  %v219 = vmul.f32 %v218, 1.442695
  %v220 = vpow.pop %v219
  %v221 = vadd.f32 %v220, 1.0
  %v222 = vrcp.pop %v221
  %v223 = vmul.f32 1.0, %v222
  %v224 = vadd.f32 %v74, %v145
  %v225 = vxor.u32 %v224, 2147483648
  %v226 = vmul.f32 %v225, 1.442695
  %v227 = vpow.pop %v226
  %v228 = vadd.f32 %v227, 1.0
  %v229 = vrcp.pop %v228
  %v230 = vmul.f32 1.0, %v229
  %v232 = vlaneseq
  %v233 = vshrl.u32 %v232, 7
  %v234 = vsub.s32 0, %v233
  %v235 = vrot.slane %v71, %v234
  %v237 = vadd.f32 %v214, %v235
  %v238 = vmul.f32 %v223, %v237
  %v239 = vadd.f32 %v75, %v238
  %v240 = vtanh.pop %v239
  %v241 = vsub.f32 %v72, %v240
  %v242 = vmul.f32 %v230, %v241
  %v243 = vadd.f32 %v240, %v242
  %244 = vst [vmem:[%s4] sm:$0xff] %v243
  %s245 = scalar_lea.vmem %s0, 24
  %v246 = vld [vmem:[%s245] sm:$0xff]
  %v247 = vld [vmem:[%s245 + $0x8] sm:$0xff]
  %v248 = vld [vmem:[%s245 + $0x10] sm:$0xff]
  %249 = vmatprep.subr.mxu0 %v69
  %250 = vmatpush1.msra.mxu0 %v68
  %251 = vmatprep.subr.mxu0 %v66
  %252 = vmatpush1.msra.mxu0 %v65
  %253 = vmatprep.subr.mxu0 %v63
  %254 = vmatpush1.msra.mxu0 %v62
  %255 = vmatprep.subr.mxu0 %v60
  %256 = vmatpush1.msra.mxu0 %v59
  %257 = vmatprep.subr.mxu0 %v57
  %258 = vmatpush1.msra.mxu0 %v56
  %259 = vmatprep.subr.mxu0 %v54
  %260 = vmatpush1.msra.mxu0 %v53
  %261 = vmatprep.subr.mxu0 %v51
  %262 = vmatpush1.msra.mxu0 %v50
  %263 = vmatprep.subr.mxu0 %v48
  %264 = vmatpush1.msra.mxu0 %v47
  %265 = vmatprep.subr.mxu0 %v45
  %266 = vmatpush1.msra.mxu0 %v44
  %267 = vmatprep.subr.mxu0 %v42
  %268 = vmatpush1.msra.mxu0 %v41
  %269 = vmatprep.subr.mxu0 %v39
  %270 = vmatpush1.msra.mxu0 %v38
  %271 = vmatprep.subr.mxu0 %v36
  %272 = vmatpush1.msra.mxu0 %v35
  %273 = vmatprep.subr.mxu0 %v33
  %274 = vmatpush1.msra.mxu0 %v32
  %275 = vmatprep.subr.mxu0 %v30
  %276 = vmatpush1.msra.mxu0 %v29
  %277 = vmatprep.subr.mxu0 %v27
  %278 = vmatpush1.msra.mxu0 %v26
  %279 = vmatprep.subr.mxu0 %v24
  %280 = vmatpush1.msra.mxu0 %v23
  %281 = vmatprep.subr.mxu0 0.0
  %282 = vmatpush2.msra.mxu0 0.0
  %283 = vmatprep.subr.mxu0 0.0
  %284 = vmatpush2.msra.mxu0 0.0
  %285 = vmatprep.subr.mxu0 0.0
  %286 = vmatpush2.msra.mxu0 0.0
  %287 = vmatprep.subr.mxu0 0.0
  %288 = vmatpush2.msra.mxu0 0.0
  %289 = vmatprep.subr.mxu0 0.0
  %290 = vmatpush2.msra.mxu0 0.0
  %291 = vmatprep.subr.mxu0 0.0
  %292 = vmatpush2.msra.mxu0 0.0
  %293 = vmatprep.subr.mxu0 0.0
  %294 = vmatpush2.msra.mxu0 0.0
  %295 = vmatprep.subr.mxu0 0.0
  %296 = vmatpush2.msra.mxu0 0.0
  %297 = vmatprep.subr.mxu0 0.0
  %298 = vmatpush2.msra.mxu0 0.0
  %299 = vmatprep.subr.mxu0 0.0
  %300 = vmatpush2.msra.mxu0 0.0
  %301 = vmatprep.subr.mxu0 0.0
  %302 = vmatpush2.msra.mxu0 0.0
  %303 = vmatprep.subr.mxu0 0.0
  %304 = vmatpush2.msra.mxu0 0.0
  %305 = vmatprep.subr.mxu0 0.0
  %306 = vmatpush2.msra.mxu0 0.0
  %307 = vmatprep.subr.mxu0 0.0
  %308 = vmatpush2.msra.mxu0 0.0
  %309 = vmatprep.subr.mxu0 0.0
  %310 = vmatpush2.msra.mxu0 0.0
  %311 = vmatprep.subr.mxu0 0.0
  %312 = vmatpush2.msra.mxu0 0.0
  %313 = vmatprep.mubr.f32.mxu0 0.0
  %314 = vmatmul.mubr.f32.gmra.mxu0 %v243
  %v315 = vpop.f32.mrf.mxu0
  %v316 = vadd.f32 0.0, %v315
  %v317 = vpop.f32.mrf.mxu0
  %v318 = vadd.f32 0.0, %v317
  %319 = vdwg.mxu0
  %320 = vmatprep.subr.mxu0 0.0
  %321 = vmatpush1.msra.mxu0 %v70
  %322 = vmatprep.subr.mxu0 0.0
  %323 = vmatpush1.msra.mxu0 %v67
  %324 = vmatprep.subr.mxu0 0.0
  %325 = vmatpush1.msra.mxu0 %v64
  %326 = vmatprep.subr.mxu0 0.0
  %327 = vmatpush1.msra.mxu0 %v61
  %328 = vmatprep.subr.mxu0 0.0
  %329 = vmatpush1.msra.mxu0 %v58
  %330 = vmatprep.subr.mxu0 0.0
  %331 = vmatpush1.msra.mxu0 %v55
  %332 = vmatprep.subr.mxu0 0.0
  %333 = vmatpush1.msra.mxu0 %v52
  %334 = vmatprep.subr.mxu0 0.0
  %335 = vmatpush1.msra.mxu0 %v49
  %336 = vmatprep.subr.mxu0 0.0
  %337 = vmatpush1.msra.mxu0 %v46
  %338 = vmatprep.subr.mxu0 0.0
  %339 = vmatpush1.msra.mxu0 %v43
  %340 = vmatprep.subr.mxu0 0.0
  %341 = vmatpush1.msra.mxu0 %v40
  %342 = vmatprep.subr.mxu0 0.0
  %343 = vmatpush1.msra.mxu0 %v37
  %344 = vmatprep.subr.mxu0 0.0
  %345 = vmatpush1.msra.mxu0 %v34
  %346 = vmatprep.subr.mxu0 0.0
  %347 = vmatpush1.msra.mxu0 %v31
  %348 = vmatprep.subr.mxu0 0.0
  %349 = vmatpush1.msra.mxu0 %v28
  %350 = vmatprep.subr.mxu0 0.0
  %351 = vmatpush1.msra.mxu0 %v25
  %352 = vmatprep.subr.mxu0 0.0
  %353 = vmatpush2.msra.mxu0 0.0
  %354 = vmatprep.subr.mxu0 0.0
  %355 = vmatpush2.msra.mxu0 0.0
  %356 = vmatprep.subr.mxu0 0.0
  %357 = vmatpush2.msra.mxu0 0.0
  %358 = vmatprep.subr.mxu0 0.0
  %359 = vmatpush2.msra.mxu0 0.0
  %360 = vmatprep.subr.mxu0 0.0
  %361 = vmatpush2.msra.mxu0 0.0
  %362 = vmatprep.subr.mxu0 0.0
  %363 = vmatpush2.msra.mxu0 0.0
  %364 = vmatprep.subr.mxu0 0.0
  %365 = vmatpush2.msra.mxu0 0.0
  %366 = vmatprep.subr.mxu0 0.0
  %367 = vmatpush2.msra.mxu0 0.0
  %368 = vmatprep.subr.mxu0 0.0
  %369 = vmatpush2.msra.mxu0 0.0
  %370 = vmatprep.subr.mxu0 0.0
  %371 = vmatpush2.msra.mxu0 0.0
  %372 = vmatprep.subr.mxu0 0.0
  %373 = vmatpush2.msra.mxu0 0.0
  %374 = vmatprep.subr.mxu0 0.0
  %375 = vmatpush2.msra.mxu0 0.0
  %376 = vmatprep.subr.mxu0 0.0
  %377 = vmatpush2.msra.mxu0 0.0
  %378 = vmatprep.subr.mxu0 0.0
  %379 = vmatpush2.msra.mxu0 0.0
  %380 = vmatprep.subr.mxu0 0.0
  %381 = vmatpush2.msra.mxu0 0.0
  %382 = vmatprep.subr.mxu0 0.0
  %383 = vmatpush2.msra.mxu0 0.0
  %384 = vmatprep.mubr.f32.mxu0 0.0
  %385 = vmatmul.mubr.f32.gmra.mxu0 %v243
  %v386 = vpop.f32.mrf.mxu0
  %v387 = vadd.f32 0.0, %v386
  %v388 = vpop.f32.mrf.mxu0
  %389 = vdwg.mxu0
  %v390 = vadd.f32 %v246, %v316
  %v391 = vxor.u32 %v390, 2147483648
  %v392 = vmul.f32 %v391, 1.442695
  %v393 = vpow.pop %v392
  %v394 = vadd.f32 %v393, 1.0
  %v395 = vrcp.pop %v394
  %v396 = vmul.f32 1.0, %v395
  %v397 = vadd.f32 %v247, %v318
  %v398 = vxor.u32 %v397, 2147483648
  %v399 = vmul.f32 %v398, 1.442695
  %v400 = vpow.pop %v399
  %v401 = vadd.f32 %v400, 1.0
  %v402 = vrcp.pop %v401
  %v403 = vmul.f32 1.0, %v402
  %v404 = vadd.f32 %v387, %v235
  %v405 = vmul.f32 %v396, %v404
  %v406 = vadd.f32 %v248, %v405
  %v407 = vtanh.pop %v406
  %v408 = vsub.f32 %v243, %v407
  %v409 = vmul.f32 %v403, %v408
  %v410 = vadd.f32 %v407, %v409
  %s411 = scalar_lea.vmem %s4, 8
  %412 = vst [vmem:[%s411] sm:$0xff] %v410
  %s413 = scalar_lea.vmem %s0, 48
  %v414 = vld [vmem:[%s413] sm:$0xff]
  %v415 = vld [vmem:[%s413 + $0x8] sm:$0xff]
  %v416 = vld [vmem:[%s413 + $0x10] sm:$0xff]
  %417 = vmatprep.subr.mxu0 %v69
  %418 = vmatpush1.msra.mxu0 %v68
  %419 = vmatprep.subr.mxu0 %v66
  %420 = vmatpush1.msra.mxu0 %v65
  %421 = vmatprep.subr.mxu0 %v63
  %422 = vmatpush1.msra.mxu0 %v62
  %423 = vmatprep.subr.mxu0 %v60
  %424 = vmatpush1.msra.mxu0 %v59
  %425 = vmatprep.subr.mxu0 %v57
  %426 = vmatpush1.msra.mxu0 %v56
  %427 = vmatprep.subr.mxu0 %v54
  %428 = vmatpush1.msra.mxu0 %v53
  %429 = vmatprep.subr.mxu0 %v51
  %430 = vmatpush1.msra.mxu0 %v50
  %431 = vmatprep.subr.mxu0 %v48
  %432 = vmatpush1.msra.mxu0 %v47
  %433 = vmatprep.subr.mxu0 %v45
  %434 = vmatpush1.msra.mxu0 %v44
  %435 = vmatprep.subr.mxu0 %v42
  %436 = vmatpush1.msra.mxu0 %v41
  %437 = vmatprep.subr.mxu0 %v39
  %438 = vmatpush1.msra.mxu0 %v38
  %439 = vmatprep.subr.mxu0 %v36
  %440 = vmatpush1.msra.mxu0 %v35
  %441 = vmatprep.subr.mxu0 %v33
  %442 = vmatpush1.msra.mxu0 %v32
  %443 = vmatprep.subr.mxu0 %v30
  %444 = vmatpush1.msra.mxu0 %v29
  %445 = vmatprep.subr.mxu0 %v27
  %446 = vmatpush1.msra.mxu0 %v26
  %447 = vmatprep.subr.mxu0 %v24
  %448 = vmatpush1.msra.mxu0 %v23
  %449 = vmatprep.subr.mxu0 0.0
  %450 = vmatpush2.msra.mxu0 0.0
  %451 = vmatprep.subr.mxu0 0.0
  %452 = vmatpush2.msra.mxu0 0.0
  %453 = vmatprep.subr.mxu0 0.0
  %454 = vmatpush2.msra.mxu0 0.0
  %455 = vmatprep.subr.mxu0 0.0
  %456 = vmatpush2.msra.mxu0 0.0
  %457 = vmatprep.subr.mxu0 0.0
  %458 = vmatpush2.msra.mxu0 0.0
  %459 = vmatprep.subr.mxu0 0.0
  %460 = vmatpush2.msra.mxu0 0.0
  %461 = vmatprep.subr.mxu0 0.0
  %462 = vmatpush2.msra.mxu0 0.0
  %463 = vmatprep.subr.mxu0 0.0
  %464 = vmatpush2.msra.mxu0 0.0
  %465 = vmatprep.subr.mxu0 0.0
  %466 = vmatpush2.msra.mxu0 0.0
  %467 = vmatprep.subr.mxu0 0.0
  %468 = vmatpush2.msra.mxu0 0.0
  %469 = vmatprep.subr.mxu0 0.0
  %470 = vmatpush2.msra.mxu0 0.0
  %471 = vmatprep.subr.mxu0 0.0
  %472 = vmatpush2.msra.mxu0 0.0
  %473 = vmatprep.subr.mxu0 0.0
  %474 = vmatpush2.msra.mxu0 0.0
  %475 = vmatprep.subr.mxu0 0.0
  %476 = vmatpush2.msra.mxu0 0.0
  %477 = vmatprep.subr.mxu0 0.0
  %478 = vmatpush2.msra.mxu0 0.0
  %479 = vmatprep.subr.mxu0 0.0
  %480 = vmatpush2.msra.mxu0 0.0
  %481 = vmatprep.mubr.f32.mxu0 0.0
  %482 = vmatmul.mubr.f32.gmra.mxu0 %v410
  %v483 = vpop.f32.mrf.mxu0
  %v484 = vadd.f32 0.0, %v483
  %v485 = vpop.f32.mrf.mxu0
  %v486 = vadd.f32 0.0, %v485
  %487 = vdwg.mxu0
  %488 = vmatprep.subr.mxu0 0.0
  %489 = vmatpush1.msra.mxu0 %v70
  %490 = vmatprep.subr.mxu0 0.0
  %491 = vmatpush1.msra.mxu0 %v67
  %492 = vmatprep.subr.mxu0 0.0
  %493 = vmatpush1.msra.mxu0 %v64
  %494 = vmatprep.subr.mxu0 0.0
  %495 = vmatpush1.msra.mxu0 %v61
  %496 = vmatprep.subr.mxu0 0.0
  %497 = vmatpush1.msra.mxu0 %v58
  %498 = vmatprep.subr.mxu0 0.0
  %499 = vmatpush1.msra.mxu0 %v55
  %500 = vmatprep.subr.mxu0 0.0
  %501 = vmatpush1.msra.mxu0 %v52
  %502 = vmatprep.subr.mxu0 0.0
  %503 = vmatpush1.msra.mxu0 %v49
  %504 = vmatprep.subr.mxu0 0.0
  %505 = vmatpush1.msra.mxu0 %v46
  %506 = vmatprep.subr.mxu0 0.0
  %507 = vmatpush1.msra.mxu0 %v43
  %508 = vmatprep.subr.mxu0 0.0
  %509 = vmatpush1.msra.mxu0 %v40
  %510 = vmatprep.subr.mxu0 0.0
  %511 = vmatpush1.msra.mxu0 %v37
  %512 = vmatprep.subr.mxu0 0.0
  %513 = vmatpush1.msra.mxu0 %v34
  %514 = vmatprep.subr.mxu0 0.0
  %515 = vmatpush1.msra.mxu0 %v31
  %516 = vmatprep.subr.mxu0 0.0
  %517 = vmatpush1.msra.mxu0 %v28
  %518 = vmatprep.subr.mxu0 0.0
  %519 = vmatpush1.msra.mxu0 %v25
  %520 = vmatprep.subr.mxu0 0.0
  %521 = vmatpush2.msra.mxu0 0.0
  %522 = vmatprep.subr.mxu0 0.0
  %523 = vmatpush2.msra.mxu0 0.0
  %524 = vmatprep.subr.mxu0 0.0
  %525 = vmatpush2.msra.mxu0 0.0
  %526 = vmatprep.subr.mxu0 0.0
  %527 = vmatpush2.msra.mxu0 0.0
  %528 = vmatprep.subr.mxu0 0.0
  %529 = vmatpush2.msra.mxu0 0.0
  %530 = vmatprep.subr.mxu0 0.0
  %531 = vmatpush2.msra.mxu0 0.0
  %532 = vmatprep.subr.mxu0 0.0
  %533 = vmatpush2.msra.mxu0 0.0
  %534 = vmatprep.subr.mxu0 0.0
  %535 = vmatpush2.msra.mxu0 0.0
  %536 = vmatprep.subr.mxu0 0.0
  %537 = vmatpush2.msra.mxu0 0.0
  %538 = vmatprep.subr.mxu0 0.0
  %539 = vmatpush2.msra.mxu0 0.0
  %540 = vmatprep.subr.mxu0 0.0
  %541 = vmatpush2.msra.mxu0 0.0
  %542 = vmatprep.subr.mxu0 0.0
  %543 = vmatpush2.msra.mxu0 0.0
  %544 = vmatprep.subr.mxu0 0.0
  %545 = vmatpush2.msra.mxu0 0.0
  %546 = vmatprep.subr.mxu0 0.0
  %547 = vmatpush2.msra.mxu0 0.0
  %548 = vmatprep.subr.mxu0 0.0
  %549 = vmatpush2.msra.mxu0 0.0
  %550 = vmatprep.subr.mxu0 0.0
  %551 = vmatpush2.msra.mxu0 0.0
  %552 = vmatprep.mubr.f32.mxu0 0.0
  %553 = vmatmul.mubr.f32.gmra.mxu0 %v410
  %v554 = vpop.f32.mrf.mxu0
  %v555 = vadd.f32 0.0, %v554
  %v556 = vpop.f32.mrf.mxu0
  %557 = vdwg.mxu0
  %v558 = vadd.f32 %v414, %v484
  %v559 = vxor.u32 %v558, 2147483648
  %v560 = vmul.f32 %v559, 1.442695
  %v561 = vpow.pop %v560
  %v562 = vadd.f32 %v561, 1.0
  %v563 = vrcp.pop %v562
  %v564 = vmul.f32 1.0, %v563
  %v565 = vadd.f32 %v415, %v486
  %v566 = vxor.u32 %v565, 2147483648
  %v567 = vmul.f32 %v566, 1.442695
  %v568 = vpow.pop %v567
  %v569 = vadd.f32 %v568, 1.0
  %v570 = vrcp.pop %v569
  %v571 = vmul.f32 1.0, %v570
  %v572 = vadd.f32 %v555, %v235
  %v573 = vmul.f32 %v564, %v572
  %v574 = vadd.f32 %v416, %v573
  %v575 = vtanh.pop %v574
  %v576 = vsub.f32 %v410, %v575
  %v577 = vmul.f32 %v571, %v576
  %v578 = vadd.f32 %v575, %v577
  %s579 = scalar_lea.vmem %s4, 16
  %580 = vst [vmem:[%s579] sm:$0xff] %v578
  %s581 = scalar_lea.vmem %s0, 72
  %v582 = vld [vmem:[%s581] sm:$0xff]
  %v583 = vld [vmem:[%s581 + $0x8] sm:$0xff]
  %v584 = vld [vmem:[%s581 + $0x10] sm:$0xff]
  %585 = vmatprep.subr.mxu0 %v69
  %586 = vmatpush1.msra.mxu0 %v68
  %587 = vmatprep.subr.mxu0 %v66
  %588 = vmatpush1.msra.mxu0 %v65
  %589 = vmatprep.subr.mxu0 %v63
  %590 = vmatpush1.msra.mxu0 %v62
  %591 = vmatprep.subr.mxu0 %v60
  %592 = vmatpush1.msra.mxu0 %v59
  %593 = vmatprep.subr.mxu0 %v57
  %594 = vmatpush1.msra.mxu0 %v56
  %595 = vmatprep.subr.mxu0 %v54
  %596 = vmatpush1.msra.mxu0 %v53
  %597 = vmatprep.subr.mxu0 %v51
  %598 = vmatpush1.msra.mxu0 %v50
  %599 = vmatprep.subr.mxu0 %v48
  %600 = vmatpush1.msra.mxu0 %v47
  %601 = vmatprep.subr.mxu0 %v45
  %602 = vmatpush1.msra.mxu0 %v44
  %603 = vmatprep.subr.mxu0 %v42
  %604 = vmatpush1.msra.mxu0 %v41
  %605 = vmatprep.subr.mxu0 %v39
  %606 = vmatpush1.msra.mxu0 %v38
  %607 = vmatprep.subr.mxu0 %v36
  %608 = vmatpush1.msra.mxu0 %v35
  %609 = vmatprep.subr.mxu0 %v33
  %610 = vmatpush1.msra.mxu0 %v32
  %611 = vmatprep.subr.mxu0 %v30
  %612 = vmatpush1.msra.mxu0 %v29
  %613 = vmatprep.subr.mxu0 %v27
  %614 = vmatpush1.msra.mxu0 %v26
  %615 = vmatprep.subr.mxu0 %v24
  %616 = vmatpush1.msra.mxu0 %v23
  %617 = vmatprep.subr.mxu0 0.0
  %618 = vmatpush2.msra.mxu0 0.0
  %619 = vmatprep.subr.mxu0 0.0
  %620 = vmatpush2.msra.mxu0 0.0
  %621 = vmatprep.subr.mxu0 0.0
  %622 = vmatpush2.msra.mxu0 0.0
  %623 = vmatprep.subr.mxu0 0.0
  %624 = vmatpush2.msra.mxu0 0.0
  %625 = vmatprep.subr.mxu0 0.0
  %626 = vmatpush2.msra.mxu0 0.0
  %627 = vmatprep.subr.mxu0 0.0
  %628 = vmatpush2.msra.mxu0 0.0
  %629 = vmatprep.subr.mxu0 0.0
  %630 = vmatpush2.msra.mxu0 0.0
  %631 = vmatprep.subr.mxu0 0.0
  %632 = vmatpush2.msra.mxu0 0.0
  %633 = vmatprep.subr.mxu0 0.0
  %634 = vmatpush2.msra.mxu0 0.0
  %635 = vmatprep.subr.mxu0 0.0
  %636 = vmatpush2.msra.mxu0 0.0
  %637 = vmatprep.subr.mxu0 0.0
  %638 = vmatpush2.msra.mxu0 0.0
  %639 = vmatprep.subr.mxu0 0.0
  %640 = vmatpush2.msra.mxu0 0.0
  %641 = vmatprep.subr.mxu0 0.0
  %642 = vmatpush2.msra.mxu0 0.0
  %643 = vmatprep.subr.mxu0 0.0
  %644 = vmatpush2.msra.mxu0 0.0
  %645 = vmatprep.subr.mxu0 0.0
  %646 = vmatpush2.msra.mxu0 0.0
  %647 = vmatprep.subr.mxu0 0.0
  %648 = vmatpush2.msra.mxu0 0.0
  %649 = vmatprep.mubr.f32.mxu0 0.0
  %650 = vmatmul.mubr.f32.gmra.mxu0 %v578
  %v651 = vpop.f32.mrf.mxu0
  %v652 = vadd.f32 0.0, %v651
  %v653 = vpop.f32.mrf.mxu0
  %v654 = vadd.f32 0.0, %v653
  %655 = vdwg.mxu0
  %656 = vmatprep.subr.mxu0 0.0
  %657 = vmatpush1.msra.mxu0 %v70
  %658 = vmatprep.subr.mxu0 0.0
  %659 = vmatpush1.msra.mxu0 %v67
  %660 = vmatprep.subr.mxu0 0.0
  %661 = vmatpush1.msra.mxu0 %v64
  %662 = vmatprep.subr.mxu0 0.0
  %663 = vmatpush1.msra.mxu0 %v61
  %664 = vmatprep.subr.mxu0 0.0
  %665 = vmatpush1.msra.mxu0 %v58
  %666 = vmatprep.subr.mxu0 0.0
  %667 = vmatpush1.msra.mxu0 %v55
  %668 = vmatprep.subr.mxu0 0.0
  %669 = vmatpush1.msra.mxu0 %v52
  %670 = vmatprep.subr.mxu0 0.0
  %671 = vmatpush1.msra.mxu0 %v49
  %672 = vmatprep.subr.mxu0 0.0
  %673 = vmatpush1.msra.mxu0 %v46
  %674 = vmatprep.subr.mxu0 0.0
  %675 = vmatpush1.msra.mxu0 %v43
  %676 = vmatprep.subr.mxu0 0.0
  %677 = vmatpush1.msra.mxu0 %v40
  %678 = vmatprep.subr.mxu0 0.0
  %679 = vmatpush1.msra.mxu0 %v37
  %680 = vmatprep.subr.mxu0 0.0
  %681 = vmatpush1.msra.mxu0 %v34
  %682 = vmatprep.subr.mxu0 0.0
  %683 = vmatpush1.msra.mxu0 %v31
  %684 = vmatprep.subr.mxu0 0.0
  %685 = vmatpush1.msra.mxu0 %v28
  %686 = vmatprep.subr.mxu0 0.0
  %687 = vmatpush1.msra.mxu0 %v25
  %688 = vmatprep.subr.mxu0 0.0
  %689 = vmatpush2.msra.mxu0 0.0
  %690 = vmatprep.subr.mxu0 0.0
  %691 = vmatpush2.msra.mxu0 0.0
  %692 = vmatprep.subr.mxu0 0.0
  %693 = vmatpush2.msra.mxu0 0.0
  %694 = vmatprep.subr.mxu0 0.0
  %695 = vmatpush2.msra.mxu0 0.0
  %696 = vmatprep.subr.mxu0 0.0
  %697 = vmatpush2.msra.mxu0 0.0
  %698 = vmatprep.subr.mxu0 0.0
  %699 = vmatpush2.msra.mxu0 0.0
  %700 = vmatprep.subr.mxu0 0.0
  %701 = vmatpush2.msra.mxu0 0.0
  %702 = vmatprep.subr.mxu0 0.0
  %703 = vmatpush2.msra.mxu0 0.0
  %704 = vmatprep.subr.mxu0 0.0
  %705 = vmatpush2.msra.mxu0 0.0
  %706 = vmatprep.subr.mxu0 0.0
  %707 = vmatpush2.msra.mxu0 0.0
  %708 = vmatprep.subr.mxu0 0.0
  %709 = vmatpush2.msra.mxu0 0.0
  %710 = vmatprep.subr.mxu0 0.0
  %711 = vmatpush2.msra.mxu0 0.0
  %712 = vmatprep.subr.mxu0 0.0
  %713 = vmatpush2.msra.mxu0 0.0
  %714 = vmatprep.subr.mxu0 0.0
  %715 = vmatpush2.msra.mxu0 0.0
  %716 = vmatprep.subr.mxu0 0.0
  %717 = vmatpush2.msra.mxu0 0.0
  %718 = vmatprep.subr.mxu0 0.0
  %719 = vmatpush2.msra.mxu0 0.0
  %720 = vmatprep.mubr.f32.mxu0 0.0
  %721 = vmatmul.mubr.f32.gmra.mxu0 %v578
  %v722 = vpop.f32.mrf.mxu0
  %v723 = vadd.f32 0.0, %v722
  %v724 = vpop.f32.mrf.mxu0
  %725 = vdwg.mxu0
  %v726 = vadd.f32 %v582, %v652
  %v727 = vxor.u32 %v726, 2147483648
  %v728 = vmul.f32 %v727, 1.442695
  %v729 = vpow.pop %v728
  %v730 = vadd.f32 %v729, 1.0
  %v731 = vrcp.pop %v730
  %v732 = vmul.f32 1.0, %v731
  %v733 = vadd.f32 %v583, %v654
  %v734 = vxor.u32 %v733, 2147483648
  %v735 = vmul.f32 %v734, 1.442695
  %v736 = vpow.pop %v735
  %v737 = vadd.f32 %v736, 1.0
  %v738 = vrcp.pop %v737
  %v739 = vmul.f32 1.0, %v738
  %v740 = vadd.f32 %v723, %v235
  %v741 = vmul.f32 %v732, %v740
  %v742 = vadd.f32 %v584, %v741
  %v743 = vtanh.pop %v742
  %v744 = vsub.f32 %v578, %v743
  %v745 = vmul.f32 %v739, %v744
  %v746 = vadd.f32 %v743, %v745
  %s747 = scalar_lea.vmem %s4, 24
  %748 = vst [vmem:[%s747] sm:$0xff] %v746
  %s749 = scalar_lea.vmem %s0, 96
  %v750 = vld [vmem:[%s749] sm:$0xff]
  %v751 = vld [vmem:[%s749 + $0x8] sm:$0xff]
  %v752 = vld [vmem:[%s749 + $0x10] sm:$0xff]
  %753 = vmatprep.subr.mxu0 %v69
  %754 = vmatpush1.msra.mxu0 %v68
  %755 = vmatprep.subr.mxu0 %v66
  %756 = vmatpush1.msra.mxu0 %v65
  %757 = vmatprep.subr.mxu0 %v63
  %758 = vmatpush1.msra.mxu0 %v62
  %759 = vmatprep.subr.mxu0 %v60
  %760 = vmatpush1.msra.mxu0 %v59
  %761 = vmatprep.subr.mxu0 %v57
  %762 = vmatpush1.msra.mxu0 %v56
  %763 = vmatprep.subr.mxu0 %v54
  %764 = vmatpush1.msra.mxu0 %v53
  %765 = vmatprep.subr.mxu0 %v51
  %766 = vmatpush1.msra.mxu0 %v50
  %767 = vmatprep.subr.mxu0 %v48
  %768 = vmatpush1.msra.mxu0 %v47
  %769 = vmatprep.subr.mxu0 %v45
  %770 = vmatpush1.msra.mxu0 %v44
  %771 = vmatprep.subr.mxu0 %v42
  %772 = vmatpush1.msra.mxu0 %v41
  %773 = vmatprep.subr.mxu0 %v39
  %774 = vmatpush1.msra.mxu0 %v38
  %775 = vmatprep.subr.mxu0 %v36
  %776 = vmatpush1.msra.mxu0 %v35
  %777 = vmatprep.subr.mxu0 %v33
  %778 = vmatpush1.msra.mxu0 %v32
  %779 = vmatprep.subr.mxu0 %v30
  %780 = vmatpush1.msra.mxu0 %v29
  %781 = vmatprep.subr.mxu0 %v27
  %782 = vmatpush1.msra.mxu0 %v26
  %783 = vmatprep.subr.mxu0 %v24
  %784 = vmatpush1.msra.mxu0 %v23
  %785 = vmatprep.subr.mxu0 0.0
  %786 = vmatpush2.msra.mxu0 0.0
  %787 = vmatprep.subr.mxu0 0.0
  %788 = vmatpush2.msra.mxu0 0.0
  %789 = vmatprep.subr.mxu0 0.0
  %790 = vmatpush2.msra.mxu0 0.0
  %791 = vmatprep.subr.mxu0 0.0
  %792 = vmatpush2.msra.mxu0 0.0
  %793 = vmatprep.subr.mxu0 0.0
  %794 = vmatpush2.msra.mxu0 0.0
  %795 = vmatprep.subr.mxu0 0.0
  %796 = vmatpush2.msra.mxu0 0.0
  %797 = vmatprep.subr.mxu0 0.0
  %798 = vmatpush2.msra.mxu0 0.0
  %799 = vmatprep.subr.mxu0 0.0
  %800 = vmatpush2.msra.mxu0 0.0
  %801 = vmatprep.subr.mxu0 0.0
  %802 = vmatpush2.msra.mxu0 0.0
  %803 = vmatprep.subr.mxu0 0.0
  %804 = vmatpush2.msra.mxu0 0.0
  %805 = vmatprep.subr.mxu0 0.0
  %806 = vmatpush2.msra.mxu0 0.0
  %807 = vmatprep.subr.mxu0 0.0
  %808 = vmatpush2.msra.mxu0 0.0
  %809 = vmatprep.subr.mxu0 0.0
  %810 = vmatpush2.msra.mxu0 0.0
  %811 = vmatprep.subr.mxu0 0.0
  %812 = vmatpush2.msra.mxu0 0.0
  %813 = vmatprep.subr.mxu0 0.0
  %814 = vmatpush2.msra.mxu0 0.0
  %815 = vmatprep.subr.mxu0 0.0
  %816 = vmatpush2.msra.mxu0 0.0
  %817 = vmatprep.mubr.f32.mxu0 0.0
  %818 = vmatmul.mubr.f32.gmra.mxu0 %v746
  %v819 = vpop.f32.mrf.mxu0
  %v820 = vadd.f32 0.0, %v819
  %v821 = vpop.f32.mrf.mxu0
  %v822 = vadd.f32 0.0, %v821
  %823 = vdwg.mxu0
  %824 = vmatprep.subr.mxu0 0.0
  %825 = vmatpush1.msra.mxu0 %v70
  %826 = vmatprep.subr.mxu0 0.0
  %827 = vmatpush1.msra.mxu0 %v67
  %828 = vmatprep.subr.mxu0 0.0
  %829 = vmatpush1.msra.mxu0 %v64
  %830 = vmatprep.subr.mxu0 0.0
  %831 = vmatpush1.msra.mxu0 %v61
  %832 = vmatprep.subr.mxu0 0.0
  %833 = vmatpush1.msra.mxu0 %v58
  %834 = vmatprep.subr.mxu0 0.0
  %835 = vmatpush1.msra.mxu0 %v55
  %836 = vmatprep.subr.mxu0 0.0
  %837 = vmatpush1.msra.mxu0 %v52
  %838 = vmatprep.subr.mxu0 0.0
  %839 = vmatpush1.msra.mxu0 %v49
  %840 = vmatprep.subr.mxu0 0.0
  %841 = vmatpush1.msra.mxu0 %v46
  %842 = vmatprep.subr.mxu0 0.0
  %843 = vmatpush1.msra.mxu0 %v43
  %844 = vmatprep.subr.mxu0 0.0
  %845 = vmatpush1.msra.mxu0 %v40
  %846 = vmatprep.subr.mxu0 0.0
  %847 = vmatpush1.msra.mxu0 %v37
  %848 = vmatprep.subr.mxu0 0.0
  %849 = vmatpush1.msra.mxu0 %v34
  %850 = vmatprep.subr.mxu0 0.0
  %851 = vmatpush1.msra.mxu0 %v31
  %852 = vmatprep.subr.mxu0 0.0
  %853 = vmatpush1.msra.mxu0 %v28
  %854 = vmatprep.subr.mxu0 0.0
  %855 = vmatpush1.msra.mxu0 %v25
  %856 = vmatprep.subr.mxu0 0.0
  %857 = vmatpush2.msra.mxu0 0.0
  %858 = vmatprep.subr.mxu0 0.0
  %859 = vmatpush2.msra.mxu0 0.0
  %860 = vmatprep.subr.mxu0 0.0
  %861 = vmatpush2.msra.mxu0 0.0
  %862 = vmatprep.subr.mxu0 0.0
  %863 = vmatpush2.msra.mxu0 0.0
  %864 = vmatprep.subr.mxu0 0.0
  %865 = vmatpush2.msra.mxu0 0.0
  %866 = vmatprep.subr.mxu0 0.0
  %867 = vmatpush2.msra.mxu0 0.0
  %868 = vmatprep.subr.mxu0 0.0
  %869 = vmatpush2.msra.mxu0 0.0
  %870 = vmatprep.subr.mxu0 0.0
  %871 = vmatpush2.msra.mxu0 0.0
  %872 = vmatprep.subr.mxu0 0.0
  %873 = vmatpush2.msra.mxu0 0.0
  %874 = vmatprep.subr.mxu0 0.0
  %875 = vmatpush2.msra.mxu0 0.0
  %876 = vmatprep.subr.mxu0 0.0
  %877 = vmatpush2.msra.mxu0 0.0
  %878 = vmatprep.subr.mxu0 0.0
  %879 = vmatpush2.msra.mxu0 0.0
  %880 = vmatprep.subr.mxu0 0.0
  %881 = vmatpush2.msra.mxu0 0.0
  %882 = vmatprep.subr.mxu0 0.0
  %883 = vmatpush2.msra.mxu0 0.0
  %884 = vmatprep.subr.mxu0 0.0
  %885 = vmatpush2.msra.mxu0 0.0
  %886 = vmatprep.subr.mxu0 0.0
  %887 = vmatpush2.msra.mxu0 0.0
  %888 = vmatprep.mubr.f32.mxu0 0.0
  %889 = vmatmul.mubr.f32.gmra.mxu0 %v746
  %v890 = vpop.f32.mrf.mxu0
  %v891 = vadd.f32 0.0, %v890
  %v892 = vpop.f32.mrf.mxu0
  %893 = vdwg.mxu0
  %v894 = vadd.f32 %v750, %v820
  %v895 = vxor.u32 %v894, 2147483648
  %v896 = vmul.f32 %v895, 1.442695
  %v897 = vpow.pop %v896
  %v898 = vadd.f32 %v897, 1.0
  %v899 = vrcp.pop %v898
  %v900 = vmul.f32 1.0, %v899
  %v901 = vadd.f32 %v751, %v822
  %v902 = vxor.u32 %v901, 2147483648
  %v903 = vmul.f32 %v902, 1.442695
  %v904 = vpow.pop %v903
  %v905 = vadd.f32 %v904, 1.0
  %v906 = vrcp.pop %v905
  %v907 = vmul.f32 1.0, %v906
  %v908 = vadd.f32 %v891, %v235
  %v909 = vmul.f32 %v900, %v908
  %v910 = vadd.f32 %v752, %v909
  %v911 = vtanh.pop %v910
  %v912 = vsub.f32 %v746, %v911
  %v913 = vmul.f32 %v907, %v912
  %v914 = vadd.f32 %v911, %v913
  %s915 = scalar_lea.vmem %s4, 32
  %916 = vst [vmem:[%s915] sm:$0xff] %v914
  %s917 = scalar_lea.vmem %s0, 120
  %v918 = vld [vmem:[%s917] sm:$0xff]
  %v919 = vld [vmem:[%s917 + $0x8] sm:$0xff]
  %v920 = vld [vmem:[%s917 + $0x10] sm:$0xff]
  %921 = vmatprep.subr.mxu0 %v69
  %922 = vmatpush1.msra.mxu0 %v68
  %923 = vmatprep.subr.mxu0 %v66
  %924 = vmatpush1.msra.mxu0 %v65
  %925 = vmatprep.subr.mxu0 %v63
  %926 = vmatpush1.msra.mxu0 %v62
  %927 = vmatprep.subr.mxu0 %v60
  %928 = vmatpush1.msra.mxu0 %v59
  %929 = vmatprep.subr.mxu0 %v57
  %930 = vmatpush1.msra.mxu0 %v56
  %931 = vmatprep.subr.mxu0 %v54
  %932 = vmatpush1.msra.mxu0 %v53
  %933 = vmatprep.subr.mxu0 %v51
  %934 = vmatpush1.msra.mxu0 %v50
  %935 = vmatprep.subr.mxu0 %v48
  %936 = vmatpush1.msra.mxu0 %v47
  %937 = vmatprep.subr.mxu0 %v45
  %938 = vmatpush1.msra.mxu0 %v44
  %939 = vmatprep.subr.mxu0 %v42
  %940 = vmatpush1.msra.mxu0 %v41
  %941 = vmatprep.subr.mxu0 %v39
  %942 = vmatpush1.msra.mxu0 %v38
  %943 = vmatprep.subr.mxu0 %v36
  %944 = vmatpush1.msra.mxu0 %v35
  %945 = vmatprep.subr.mxu0 %v33
  %946 = vmatpush1.msra.mxu0 %v32
  %947 = vmatprep.subr.mxu0 %v30
  %948 = vmatpush1.msra.mxu0 %v29
  %949 = vmatprep.subr.mxu0 %v27
  %950 = vmatpush1.msra.mxu0 %v26
  %951 = vmatprep.subr.mxu0 %v24
  %952 = vmatpush1.msra.mxu0 %v23
  %953 = vmatprep.subr.mxu0 0.0
  %954 = vmatpush2.msra.mxu0 0.0
  %955 = vmatprep.subr.mxu0 0.0
  %956 = vmatpush2.msra.mxu0 0.0
  %957 = vmatprep.subr.mxu0 0.0
  %958 = vmatpush2.msra.mxu0 0.0
  %959 = vmatprep.subr.mxu0 0.0
  %960 = vmatpush2.msra.mxu0 0.0
  %961 = vmatprep.subr.mxu0 0.0
  %962 = vmatpush2.msra.mxu0 0.0
  %963 = vmatprep.subr.mxu0 0.0
  %964 = vmatpush2.msra.mxu0 0.0
  %965 = vmatprep.subr.mxu0 0.0
  %966 = vmatpush2.msra.mxu0 0.0
  %967 = vmatprep.subr.mxu0 0.0
  %968 = vmatpush2.msra.mxu0 0.0
  %969 = vmatprep.subr.mxu0 0.0
  %970 = vmatpush2.msra.mxu0 0.0
  %971 = vmatprep.subr.mxu0 0.0
  %972 = vmatpush2.msra.mxu0 0.0
  %973 = vmatprep.subr.mxu0 0.0
  %974 = vmatpush2.msra.mxu0 0.0
  %975 = vmatprep.subr.mxu0 0.0
  %976 = vmatpush2.msra.mxu0 0.0
  %977 = vmatprep.subr.mxu0 0.0
  %978 = vmatpush2.msra.mxu0 0.0
  %979 = vmatprep.subr.mxu0 0.0
  %980 = vmatpush2.msra.mxu0 0.0
  %981 = vmatprep.subr.mxu0 0.0
  %982 = vmatpush2.msra.mxu0 0.0
  %983 = vmatprep.subr.mxu0 0.0
  %984 = vmatpush2.msra.mxu0 0.0
  %985 = vmatprep.mubr.f32.mxu0 0.0
  %986 = vmatmul.mubr.f32.gmra.mxu0 %v914
  %v987 = vpop.f32.mrf.mxu0
  %v988 = vadd.f32 0.0, %v987
  %v989 = vpop.f32.mrf.mxu0
  %v990 = vadd.f32 0.0, %v989
  %991 = vdwg.mxu0
  %992 = vmatprep.subr.mxu0 0.0
  %993 = vmatpush1.msra.mxu0 %v70
  %994 = vmatprep.subr.mxu0 0.0
  %995 = vmatpush1.msra.mxu0 %v67
  %996 = vmatprep.subr.mxu0 0.0
  %997 = vmatpush1.msra.mxu0 %v64
  %998 = vmatprep.subr.mxu0 0.0
  %999 = vmatpush1.msra.mxu0 %v61
  %1000 = vmatprep.subr.mxu0 0.0
  %1001 = vmatpush1.msra.mxu0 %v58
  %1002 = vmatprep.subr.mxu0 0.0
  %1003 = vmatpush1.msra.mxu0 %v55
  %1004 = vmatprep.subr.mxu0 0.0
  %1005 = vmatpush1.msra.mxu0 %v52
  %1006 = vmatprep.subr.mxu0 0.0
  %1007 = vmatpush1.msra.mxu0 %v49
  %1008 = vmatprep.subr.mxu0 0.0
  %1009 = vmatpush1.msra.mxu0 %v46
  %1010 = vmatprep.subr.mxu0 0.0
  %1011 = vmatpush1.msra.mxu0 %v43
  %1012 = vmatprep.subr.mxu0 0.0
  %1013 = vmatpush1.msra.mxu0 %v40
  %1014 = vmatprep.subr.mxu0 0.0
  %1015 = vmatpush1.msra.mxu0 %v37
  %1016 = vmatprep.subr.mxu0 0.0
  %1017 = vmatpush1.msra.mxu0 %v34
  %1018 = vmatprep.subr.mxu0 0.0
  %1019 = vmatpush1.msra.mxu0 %v31
  %1020 = vmatprep.subr.mxu0 0.0
  %1021 = vmatpush1.msra.mxu0 %v28
  %1022 = vmatprep.subr.mxu0 0.0
  %1023 = vmatpush1.msra.mxu0 %v25
  %1024 = vmatprep.subr.mxu0 0.0
  %1025 = vmatpush2.msra.mxu0 0.0
  %1026 = vmatprep.subr.mxu0 0.0
  %1027 = vmatpush2.msra.mxu0 0.0
  %1028 = vmatprep.subr.mxu0 0.0
  %1029 = vmatpush2.msra.mxu0 0.0
  %1030 = vmatprep.subr.mxu0 0.0
  %1031 = vmatpush2.msra.mxu0 0.0
  %1032 = vmatprep.subr.mxu0 0.0
  %1033 = vmatpush2.msra.mxu0 0.0
  %1034 = vmatprep.subr.mxu0 0.0
  %1035 = vmatpush2.msra.mxu0 0.0
  %1036 = vmatprep.subr.mxu0 0.0
  %1037 = vmatpush2.msra.mxu0 0.0
  %1038 = vmatprep.subr.mxu0 0.0
  %1039 = vmatpush2.msra.mxu0 0.0
  %1040 = vmatprep.subr.mxu0 0.0
  %1041 = vmatpush2.msra.mxu0 0.0
  %1042 = vmatprep.subr.mxu0 0.0
  %1043 = vmatpush2.msra.mxu0 0.0
  %1044 = vmatprep.subr.mxu0 0.0
  %1045 = vmatpush2.msra.mxu0 0.0
  %1046 = vmatprep.subr.mxu0 0.0
  %1047 = vmatpush2.msra.mxu0 0.0
  %1048 = vmatprep.subr.mxu0 0.0
  %1049 = vmatpush2.msra.mxu0 0.0
  %1050 = vmatprep.subr.mxu0 0.0
  %1051 = vmatpush2.msra.mxu0 0.0
  %1052 = vmatprep.subr.mxu0 0.0
  %1053 = vmatpush2.msra.mxu0 0.0
  %1054 = vmatprep.subr.mxu0 0.0
  %1055 = vmatpush2.msra.mxu0 0.0
  %1056 = vmatprep.mubr.f32.mxu0 0.0
  %1057 = vmatmul.mubr.f32.gmra.mxu0 %v914
  %v1058 = vpop.f32.mrf.mxu0
  %v1059 = vadd.f32 0.0, %v1058
  %v1060 = vpop.f32.mrf.mxu0
  %1061 = vdwg.mxu0
  %v1062 = vadd.f32 %v918, %v988
  %v1063 = vxor.u32 %v1062, 2147483648
  %v1064 = vmul.f32 %v1063, 1.442695
  %v1065 = vpow.pop %v1064
  %v1066 = vadd.f32 %v1065, 1.0
  %v1067 = vrcp.pop %v1066
  %v1068 = vmul.f32 1.0, %v1067
  %v1069 = vadd.f32 %v919, %v990
  %v1070 = vxor.u32 %v1069, 2147483648
  %v1071 = vmul.f32 %v1070, 1.442695
  %v1072 = vpow.pop %v1071
  %v1073 = vadd.f32 %v1072, 1.0
  %v1074 = vrcp.pop %v1073
  %v1075 = vmul.f32 1.0, %v1074
  %v1076 = vadd.f32 %v1059, %v235
  %v1077 = vmul.f32 %v1068, %v1076
  %v1078 = vadd.f32 %v920, %v1077
  %v1079 = vtanh.pop %v1078
  %v1080 = vsub.f32 %v914, %v1079
  %v1081 = vmul.f32 %v1075, %v1080
  %v1082 = vadd.f32 %v1079, %v1081
  %s1083 = scalar_lea.vmem %s4, 40
  %1084 = vst [vmem:[%s1083] sm:$0xff] %v1082
  %s1085 = scalar_lea.vmem %s0, 144
  %v1086 = vld [vmem:[%s1085] sm:$0xff]
  %v1087 = vld [vmem:[%s1085 + $0x8] sm:$0xff]
  %v1088 = vld [vmem:[%s1085 + $0x10] sm:$0xff]
  %1089 = vmatprep.subr.mxu0 %v69
  %1090 = vmatpush1.msra.mxu0 %v68
  %1091 = vmatprep.subr.mxu0 %v66
  %1092 = vmatpush1.msra.mxu0 %v65
  %1093 = vmatprep.subr.mxu0 %v63
  %1094 = vmatpush1.msra.mxu0 %v62
  %1095 = vmatprep.subr.mxu0 %v60
  %1096 = vmatpush1.msra.mxu0 %v59
  %1097 = vmatprep.subr.mxu0 %v57
  %1098 = vmatpush1.msra.mxu0 %v56
  %1099 = vmatprep.subr.mxu0 %v54
  %1100 = vmatpush1.msra.mxu0 %v53
  %1101 = vmatprep.subr.mxu0 %v51
  %1102 = vmatpush1.msra.mxu0 %v50
  %1103 = vmatprep.subr.mxu0 %v48
  %1104 = vmatpush1.msra.mxu0 %v47
  %1105 = vmatprep.subr.mxu0 %v45
  %1106 = vmatpush1.msra.mxu0 %v44
  %1107 = vmatprep.subr.mxu0 %v42
  %1108 = vmatpush1.msra.mxu0 %v41
  %1109 = vmatprep.subr.mxu0 %v39
  %1110 = vmatpush1.msra.mxu0 %v38
  %1111 = vmatprep.subr.mxu0 %v36
  %1112 = vmatpush1.msra.mxu0 %v35
  %1113 = vmatprep.subr.mxu0 %v33
  %1114 = vmatpush1.msra.mxu0 %v32
  %1115 = vmatprep.subr.mxu0 %v30
  %1116 = vmatpush1.msra.mxu0 %v29
  %1117 = vmatprep.subr.mxu0 %v27
  %1118 = vmatpush1.msra.mxu0 %v26
  %1119 = vmatprep.subr.mxu0 %v24
  %1120 = vmatpush1.msra.mxu0 %v23
  %1121 = vmatprep.subr.mxu0 0.0
  %1122 = vmatpush2.msra.mxu0 0.0
  %1123 = vmatprep.subr.mxu0 0.0
  %1124 = vmatpush2.msra.mxu0 0.0
  %1125 = vmatprep.subr.mxu0 0.0
  %1126 = vmatpush2.msra.mxu0 0.0
  %1127 = vmatprep.subr.mxu0 0.0
  %1128 = vmatpush2.msra.mxu0 0.0
  %1129 = vmatprep.subr.mxu0 0.0
  %1130 = vmatpush2.msra.mxu0 0.0
  %1131 = vmatprep.subr.mxu0 0.0
  %1132 = vmatpush2.msra.mxu0 0.0
  %1133 = vmatprep.subr.mxu0 0.0
  %1134 = vmatpush2.msra.mxu0 0.0
  %1135 = vmatprep.subr.mxu0 0.0
  %1136 = vmatpush2.msra.mxu0 0.0
  %1137 = vmatprep.subr.mxu0 0.0
  %1138 = vmatpush2.msra.mxu0 0.0
  %1139 = vmatprep.subr.mxu0 0.0
  %1140 = vmatpush2.msra.mxu0 0.0
  %1141 = vmatprep.subr.mxu0 0.0
  %1142 = vmatpush2.msra.mxu0 0.0
  %1143 = vmatprep.subr.mxu0 0.0
  %1144 = vmatpush2.msra.mxu0 0.0
  %1145 = vmatprep.subr.mxu0 0.0
  %1146 = vmatpush2.msra.mxu0 0.0
  %1147 = vmatprep.subr.mxu0 0.0
  %1148 = vmatpush2.msra.mxu0 0.0
  %1149 = vmatprep.subr.mxu0 0.0
  %1150 = vmatpush2.msra.mxu0 0.0
  %1151 = vmatprep.subr.mxu0 0.0
  %1152 = vmatpush2.msra.mxu0 0.0
  %1153 = vmatprep.mubr.f32.mxu0 0.0
  %1154 = vmatmul.mubr.f32.gmra.mxu0 %v1082
  %v1155 = vpop.f32.mrf.mxu0
  %v1156 = vadd.f32 0.0, %v1155
  %v1157 = vpop.f32.mrf.mxu0
  %v1158 = vadd.f32 0.0, %v1157
  %1159 = vdwg.mxu0
  %1160 = vmatprep.subr.mxu0 0.0
  %1161 = vmatpush1.msra.mxu0 %v70
  %1162 = vmatprep.subr.mxu0 0.0
  %1163 = vmatpush1.msra.mxu0 %v67
  %1164 = vmatprep.subr.mxu0 0.0
  %1165 = vmatpush1.msra.mxu0 %v64
  %1166 = vmatprep.subr.mxu0 0.0
  %1167 = vmatpush1.msra.mxu0 %v61
  %1168 = vmatprep.subr.mxu0 0.0
  %1169 = vmatpush1.msra.mxu0 %v58
  %1170 = vmatprep.subr.mxu0 0.0
  %1171 = vmatpush1.msra.mxu0 %v55
  %1172 = vmatprep.subr.mxu0 0.0
  %1173 = vmatpush1.msra.mxu0 %v52
  %1174 = vmatprep.subr.mxu0 0.0
  %1175 = vmatpush1.msra.mxu0 %v49
  %1176 = vmatprep.subr.mxu0 0.0
  %1177 = vmatpush1.msra.mxu0 %v46
  %1178 = vmatprep.subr.mxu0 0.0
  %1179 = vmatpush1.msra.mxu0 %v43
  %1180 = vmatprep.subr.mxu0 0.0
  %1181 = vmatpush1.msra.mxu0 %v40
  %1182 = vmatprep.subr.mxu0 0.0
  %1183 = vmatpush1.msra.mxu0 %v37
  %1184 = vmatprep.subr.mxu0 0.0
  %1185 = vmatpush1.msra.mxu0 %v34
  %1186 = vmatprep.subr.mxu0 0.0
  %1187 = vmatpush1.msra.mxu0 %v31
  %1188 = vmatprep.subr.mxu0 0.0
  %1189 = vmatpush1.msra.mxu0 %v28
  %1190 = vmatprep.subr.mxu0 0.0
  %1191 = vmatpush1.msra.mxu0 %v25
  %1192 = vmatprep.subr.mxu0 0.0
  %1193 = vmatpush2.msra.mxu0 0.0
  %1194 = vmatprep.subr.mxu0 0.0
  %1195 = vmatpush2.msra.mxu0 0.0
  %1196 = vmatprep.subr.mxu0 0.0
  %1197 = vmatpush2.msra.mxu0 0.0
  %1198 = vmatprep.subr.mxu0 0.0
  %1199 = vmatpush2.msra.mxu0 0.0
  %1200 = vmatprep.subr.mxu0 0.0
  %1201 = vmatpush2.msra.mxu0 0.0
  %1202 = vmatprep.subr.mxu0 0.0
  %1203 = vmatpush2.msra.mxu0 0.0
  %1204 = vmatprep.subr.mxu0 0.0
  %1205 = vmatpush2.msra.mxu0 0.0
  %1206 = vmatprep.subr.mxu0 0.0
  %1207 = vmatpush2.msra.mxu0 0.0
  %1208 = vmatprep.subr.mxu0 0.0
  %1209 = vmatpush2.msra.mxu0 0.0
  %1210 = vmatprep.subr.mxu0 0.0
  %1211 = vmatpush2.msra.mxu0 0.0
  %1212 = vmatprep.subr.mxu0 0.0
  %1213 = vmatpush2.msra.mxu0 0.0
  %1214 = vmatprep.subr.mxu0 0.0
  %1215 = vmatpush2.msra.mxu0 0.0
  %1216 = vmatprep.subr.mxu0 0.0
  %1217 = vmatpush2.msra.mxu0 0.0
  %1218 = vmatprep.subr.mxu0 0.0
  %1219 = vmatpush2.msra.mxu0 0.0
  %1220 = vmatprep.subr.mxu0 0.0
  %1221 = vmatpush2.msra.mxu0 0.0
  %1222 = vmatprep.subr.mxu0 0.0
  %1223 = vmatpush2.msra.mxu0 0.0
  %1224 = vmatprep.mubr.f32.mxu0 0.0
  %1225 = vmatmul.mubr.f32.gmra.mxu0 %v1082
  %v1226 = vpop.f32.mrf.mxu0
  %v1227 = vadd.f32 0.0, %v1226
  %v1228 = vpop.f32.mrf.mxu0
  %1229 = vdwg.mxu0
  %v1230 = vadd.f32 %v1086, %v1156
  %v1231 = vxor.u32 %v1230, 2147483648
  %v1232 = vmul.f32 %v1231, 1.442695
  %v1233 = vpow.pop %v1232
  %v1234 = vadd.f32 %v1233, 1.0
  %v1235 = vrcp.pop %v1234
  %v1236 = vmul.f32 1.0, %v1235
  %v1237 = vadd.f32 %v1087, %v1158
  %v1238 = vxor.u32 %v1237, 2147483648
  %v1239 = vmul.f32 %v1238, 1.442695
  %v1240 = vpow.pop %v1239
  %v1241 = vadd.f32 %v1240, 1.0
  %v1242 = vrcp.pop %v1241
  %v1243 = vmul.f32 1.0, %v1242
  %v1244 = vadd.f32 %v1227, %v235
  %v1245 = vmul.f32 %v1236, %v1244
  %v1246 = vadd.f32 %v1088, %v1245
  %v1247 = vtanh.pop %v1246
  %v1248 = vsub.f32 %v1082, %v1247
  %v1249 = vmul.f32 %v1243, %v1248
  %v1250 = vadd.f32 %v1247, %v1249
  %s1251 = scalar_lea.vmem %s4, 48
  %1252 = vst [vmem:[%s1251] sm:$0xff] %v1250
  %s1253 = scalar_lea.vmem %s0, 168
  %v1254 = vld [vmem:[%s1253] sm:$0xff]
  %v1255 = vld [vmem:[%s1253 + $0x8] sm:$0xff]
  %v1256 = vld [vmem:[%s1253 + $0x10] sm:$0xff]
  %1257 = vmatprep.subr.mxu0 %v69
  %1258 = vmatpush1.msra.mxu0 %v68
  %1259 = vmatprep.subr.mxu0 %v66
  %1260 = vmatpush1.msra.mxu0 %v65
  %1261 = vmatprep.subr.mxu0 %v63
  %1262 = vmatpush1.msra.mxu0 %v62
  %1263 = vmatprep.subr.mxu0 %v60
  %1264 = vmatpush1.msra.mxu0 %v59
  %1265 = vmatprep.subr.mxu0 %v57
  %1266 = vmatpush1.msra.mxu0 %v56
  %1267 = vmatprep.subr.mxu0 %v54
  %1268 = vmatpush1.msra.mxu0 %v53
  %1269 = vmatprep.subr.mxu0 %v51
  %1270 = vmatpush1.msra.mxu0 %v50
  %1271 = vmatprep.subr.mxu0 %v48
  %1272 = vmatpush1.msra.mxu0 %v47
  %1273 = vmatprep.subr.mxu0 %v45
  %1274 = vmatpush1.msra.mxu0 %v44
  %1275 = vmatprep.subr.mxu0 %v42
  %1276 = vmatpush1.msra.mxu0 %v41
  %1277 = vmatprep.subr.mxu0 %v39
  %1278 = vmatpush1.msra.mxu0 %v38
  %1279 = vmatprep.subr.mxu0 %v36
  %1280 = vmatpush1.msra.mxu0 %v35
  %1281 = vmatprep.subr.mxu0 %v33
  %1282 = vmatpush1.msra.mxu0 %v32
  %1283 = vmatprep.subr.mxu0 %v30
  %1284 = vmatpush1.msra.mxu0 %v29
  %1285 = vmatprep.subr.mxu0 %v27
  %1286 = vmatpush1.msra.mxu0 %v26
  %1287 = vmatprep.subr.mxu0 %v24
  %1288 = vmatpush1.msra.mxu0 %v23
  %1289 = vmatprep.subr.mxu0 0.0
  %1290 = vmatpush2.msra.mxu0 0.0
  %1291 = vmatprep.subr.mxu0 0.0
  %1292 = vmatpush2.msra.mxu0 0.0
  %1293 = vmatprep.subr.mxu0 0.0
  %1294 = vmatpush2.msra.mxu0 0.0
  %1295 = vmatprep.subr.mxu0 0.0
  %1296 = vmatpush2.msra.mxu0 0.0
  %1297 = vmatprep.subr.mxu0 0.0
  %1298 = vmatpush2.msra.mxu0 0.0
  %1299 = vmatprep.subr.mxu0 0.0
  %1300 = vmatpush2.msra.mxu0 0.0
  %1301 = vmatprep.subr.mxu0 0.0
  %1302 = vmatpush2.msra.mxu0 0.0
  %1303 = vmatprep.subr.mxu0 0.0
  %1304 = vmatpush2.msra.mxu0 0.0
  %1305 = vmatprep.subr.mxu0 0.0
  %1306 = vmatpush2.msra.mxu0 0.0
  %1307 = vmatprep.subr.mxu0 0.0
  %1308 = vmatpush2.msra.mxu0 0.0
  %1309 = vmatprep.subr.mxu0 0.0
  %1310 = vmatpush2.msra.mxu0 0.0
  %1311 = vmatprep.subr.mxu0 0.0
  %1312 = vmatpush2.msra.mxu0 0.0
  %1313 = vmatprep.subr.mxu0 0.0
  %1314 = vmatpush2.msra.mxu0 0.0
  %1315 = vmatprep.subr.mxu0 0.0
  %1316 = vmatpush2.msra.mxu0 0.0
  %1317 = vmatprep.subr.mxu0 0.0
  %1318 = vmatpush2.msra.mxu0 0.0
  %1319 = vmatprep.subr.mxu0 0.0
  %1320 = vmatpush2.msra.mxu0 0.0
  %1321 = vmatprep.mubr.f32.mxu0 0.0
  %1322 = vmatmul.mubr.f32.gmra.mxu0 %v1250
  %v1323 = vpop.f32.mrf.mxu0
  %v1324 = vadd.f32 0.0, %v1323
  %v1325 = vpop.f32.mrf.mxu0
  %v1326 = vadd.f32 0.0, %v1325
  %1327 = vdwg.mxu0
  %1328 = vmatprep.subr.mxu0 0.0
  %1329 = vmatpush1.msra.mxu0 %v70
  %1330 = vmatprep.subr.mxu0 0.0
  %1331 = vmatpush1.msra.mxu0 %v67
  %1332 = vmatprep.subr.mxu0 0.0
  %1333 = vmatpush1.msra.mxu0 %v64
  %1334 = vmatprep.subr.mxu0 0.0
  %1335 = vmatpush1.msra.mxu0 %v61
  %1336 = vmatprep.subr.mxu0 0.0
  %1337 = vmatpush1.msra.mxu0 %v58
  %1338 = vmatprep.subr.mxu0 0.0
  %1339 = vmatpush1.msra.mxu0 %v55
  %1340 = vmatprep.subr.mxu0 0.0
  %1341 = vmatpush1.msra.mxu0 %v52
  %1342 = vmatprep.subr.mxu0 0.0
  %1343 = vmatpush1.msra.mxu0 %v49
  %1344 = vmatprep.subr.mxu0 0.0
  %1345 = vmatpush1.msra.mxu0 %v46
  %1346 = vmatprep.subr.mxu0 0.0
  %1347 = vmatpush1.msra.mxu0 %v43
  %1348 = vmatprep.subr.mxu0 0.0
  %1349 = vmatpush1.msra.mxu0 %v40
  %1350 = vmatprep.subr.mxu0 0.0
  %1351 = vmatpush1.msra.mxu0 %v37
  %1352 = vmatprep.subr.mxu0 0.0
  %1353 = vmatpush1.msra.mxu0 %v34
  %1354 = vmatprep.subr.mxu0 0.0
  %1355 = vmatpush1.msra.mxu0 %v31
  %1356 = vmatprep.subr.mxu0 0.0
  %1357 = vmatpush1.msra.mxu0 %v28
  %1358 = vmatprep.subr.mxu0 0.0
  %1359 = vmatpush1.msra.mxu0 %v25
  %1360 = vmatprep.subr.mxu0 0.0
  %1361 = vmatpush2.msra.mxu0 0.0
  %1362 = vmatprep.subr.mxu0 0.0
  %1363 = vmatpush2.msra.mxu0 0.0
  %1364 = vmatprep.subr.mxu0 0.0
  %1365 = vmatpush2.msra.mxu0 0.0
  %1366 = vmatprep.subr.mxu0 0.0
  %1367 = vmatpush2.msra.mxu0 0.0
  %1368 = vmatprep.subr.mxu0 0.0
  %1369 = vmatpush2.msra.mxu0 0.0
  %1370 = vmatprep.subr.mxu0 0.0
  %1371 = vmatpush2.msra.mxu0 0.0
  %1372 = vmatprep.subr.mxu0 0.0
  %1373 = vmatpush2.msra.mxu0 0.0
  %1374 = vmatprep.subr.mxu0 0.0
  %1375 = vmatpush2.msra.mxu0 0.0
  %1376 = vmatprep.subr.mxu0 0.0
  %1377 = vmatpush2.msra.mxu0 0.0
  %1378 = vmatprep.subr.mxu0 0.0
  %1379 = vmatpush2.msra.mxu0 0.0
  %1380 = vmatprep.subr.mxu0 0.0
  %1381 = vmatpush2.msra.mxu0 0.0
  %1382 = vmatprep.subr.mxu0 0.0
  %1383 = vmatpush2.msra.mxu0 0.0
  %1384 = vmatprep.subr.mxu0 0.0
  %1385 = vmatpush2.msra.mxu0 0.0
  %1386 = vmatprep.subr.mxu0 0.0
  %1387 = vmatpush2.msra.mxu0 0.0
  %1388 = vmatprep.subr.mxu0 0.0
  %1389 = vmatpush2.msra.mxu0 0.0
  %1390 = vmatprep.subr.mxu0 0.0
  %1391 = vmatpush2.msra.mxu0 0.0
  %1392 = vmatprep.mubr.f32.mxu0 0.0
  %1393 = vmatmul.mubr.f32.gmra.mxu0 %v1250
  %v1394 = vpop.f32.mrf.mxu0
  %v1395 = vadd.f32 0.0, %v1394
  %v1396 = vpop.f32.mrf.mxu0
  %1397 = vdwg.mxu0
  %v1398 = vadd.f32 %v1254, %v1324
  %v1399 = vxor.u32 %v1398, 2147483648
  %v1400 = vmul.f32 %v1399, 1.442695
  %v1401 = vpow.pop %v1400
  %v1402 = vadd.f32 %v1401, 1.0
  %v1403 = vrcp.pop %v1402
  %v1404 = vmul.f32 1.0, %v1403
  %v1405 = vadd.f32 %v1255, %v1326
  %v1406 = vxor.u32 %v1405, 2147483648
  %v1407 = vmul.f32 %v1406, 1.442695
  %v1408 = vpow.pop %v1407
  %v1409 = vadd.f32 %v1408, 1.0
  %v1410 = vrcp.pop %v1409
  %v1411 = vmul.f32 1.0, %v1410
  %v1412 = vadd.f32 %v1395, %v235
  %v1413 = vmul.f32 %v1404, %v1412
  %v1414 = vadd.f32 %v1256, %v1413
  %v1415 = vtanh.pop %v1414
  %v1416 = vsub.f32 %v1250, %v1415
  %v1417 = vmul.f32 %v1411, %v1416
  %v1418 = vadd.f32 %v1415, %v1417
  %s1419 = scalar_lea.vmem %s4, 56
  %1420 = vst [vmem:[%s1419] sm:$0xff] %v1418
  %1421 = vst [vmem:[#allocation2] sm:$0xff] %v1418
  // Predicated region
  $region22: #{a_call__.1} parent=0 // pred_check
    _
  $region23: #{a_call__.1} parent=0 // pred_check_branch
    %1423 = sbr.rel (0) target = $region25
  $region24: #{a_call__.1} parent=0 // pred_region
    _
  $region25: #{a_call__.1} parent=0 // pred_fallthru
    _
  // Predicated region
  $region26: #{a_call__.1} parent=0 // pred_check
    _
  $region27: #{a_call__.1} parent=0 // pred_check_branch
    %1425 = sbr.rel (0) target = $region29
  $region28: #{a_call__.1} parent=0 // pred_region
    _
  $region29: #{a_call__.1} parent=0 // pred_fallthru
    _

</llo_original>
